<compile_context>
chip_gen: v5e
topology: v5e:2x2
jax: 0.10.0
libtpu: 0.0.40
codegen_flags: <defaults>
</compile_context>

<pallas_src>
import math
import jax
import jax.numpy as jnp
from jax.experimental import pallas as pl
from jax.experimental.pallas import tpu as pltpu

# ---------------------------------------------------------------------------
# Problem sizes (small, consistent with the module's per-instance loop)
# ---------------------------------------------------------------------------
B, C, H, W = 2, 4, 16, 16          # batch, channels, spatial
D = C * H * W                      # flattened feature dim = 1024 (lane-friendly)
HID = 256                          # hidden width of the synthetic UNet
NUM_CLASSES = 10                   # target_class = list(range(10))
NC_PAD = 16                        # classes padded to a multiple of 8 (sublane tile)

# fixed diffusion timestep (alpha_bar baked into the kernel as constants)
ALPHA_BAR = 0.5
SQRT_AB = math.sqrt(ALPHA_BAR)
SQRT_1MAB = math.sqrt(1.0 - ALPHA_BAR)
# transform (x-0.5)*2 followed by sqrt(ab)*x0 folds to a single affine map:
X_SCALE = 2.0 * SQRT_AB
X_SHIFT = -SQRT_AB


# ---------------------------------------------------------------------------
# Pallas kernel: fused transform+noising, 2 bf16 MXU matmuls (f32 accumulate),
# SiLU (f32), per-class MSE reduction, negation — all VMEM resident.
# ---------------------------------------------------------------------------
def diffusion_classifier_kernel(x_ref, eps_ref, w1_ref, b1_ref,
                                emb_ref, w2_ref, b2_ref, out_ref):
    # x_ref   : (TB, D)        f32  flattened NCHW input in [0, 1]
    # eps_ref : (TB, D)        f32  per-instance noise (shared across classes)
    # w1_ref  : (D, HID)       bf16 UNet-in projection
    # b1_ref  : (1, HID)       f32
    # emb_ref : (NC_PAD, HID)  f32  class conditioning embeddings (zero-padded)
    # w2_ref  : (HID, D)       bf16 UNet-out projection (predicts epsilon)
    # b2_ref  : (1, D)         f32
    # out_ref : (TB*NC_PAD, 1) f32  = -loss, rows ordered (b, c)
    tb = x_ref.shape[0]
    eps = eps_ref[...]

    # self.transform + forward diffusion to the fixed timestep, constant-folded:
    #   x_t = sqrt(ab) * ((x - 0.5) * 2) + sqrt(1 - ab) * eps
    x_t = (X_SCALE * x_ref[...] + X_SHIFT) + SQRT_1MAB * eps               # (TB, D) f32

    # layer 1 (MXU, bf16 operands, f32 accumulation)
    h_base = jnp.dot(x_t.astype(jnp.bfloat16), w1_ref[...],
                     preferred_element_type=jnp.float32) + b1_ref[...]     # (TB, HID)

    # class conditioning + SiLU in f32 (v5e VPU/EUP have no bf16 path)
    h = h_base[:, None, :] + emb_ref[...][None, :, :]                      # (TB, NC_PAD, HID)
    h = h * jax.nn.sigmoid(h)
    h2 = h.reshape(tb * NC_PAD, HID)                # tile-aligned merge (NC_PAD % 8 == 0)

    # layer 2 (MXU): rows = TB * NC_PAD (padding rides free inside MXU row padding)
    m = jnp.dot(h2.astype(jnp.bfloat16), w2_ref[...],
                preferred_element_type=jnp.float32)                        # (TB*NC_PAD, D)

    # residual r = b2 - eps computed once per instance, then broadcast per class:
    #   diff = (m + b2) - eps = m + r
    r = b2_ref[...] - eps                                                  # (TB, D)
    r_rep = jnp.broadcast_to(r[:, None, :], (tb, NC_PAD, D)).reshape(tb * NC_PAD, D)
    diff = m + r_rep

    # per-class denoising MSE; mean(1/D) and the loss*-1 negation folded into
    # one scalar multiply on the tiny reduced column.
    ssq = jnp.sum(diff * diff, axis=-1, keepdims=True)                     # (TB*NC_PAD, 1)
    out_ref[...] = ssq * (-1.0 / D)


def diffusion_classifier_forward(x_nchw, eps, w1_bf16, b1, emb, w2_bf16, b2, *, tb=None):
    """x_nchw: (B, C, H, W) f32 in [0,1]. Returns (B, NUM_CLASSES) f32 = -loss."""
    bsz = x_nchw.shape[0]
    tb = bsz if tb is None else tb
    assert bsz % tb == 0
    grid = (bsz // tb,)

    x_flat = x_nchw.reshape(bsz, D).astype(jnp.float32)
    eps = eps.astype(jnp.float32)

    # zero-pad the class embedding table to the sublane-aligned class count
    emb_pad = jnp.zeros((NC_PAD, HID), jnp.float32).at[:NUM_CLASSES].set(
        emb.astype(jnp.float32))

    const = lambda i: (0, 0)   # weights / biases / embeddings stay VMEM-resident
    out = pl.pallas_call(
        diffusion_classifier_kernel,
        out_shape=jax.ShapeDtypeStruct((bsz * NC_PAD, 1), jnp.float32),
        grid=grid,
        in_specs=[
            pl.BlockSpec((tb, D), lambda i: (i, 0)),        # x
            pl.BlockSpec((tb, D), lambda i: (i, 0)),        # eps
            pl.BlockSpec((D, HID), const),                  # w1 (bf16)
            pl.BlockSpec((1, HID), const),                  # b1
            pl.BlockSpec((NC_PAD, HID), const),             # emb (padded)
            pl.BlockSpec((HID, D), const),                  # w2 (bf16)
            pl.BlockSpec((1, D), const),                    # b2
        ],
        out_specs=pl.BlockSpec((tb * NC_PAD, 1), lambda i: (i, 0)),
        compiler_params=pltpu.CompilerParams(
            dimension_semantics=("parallel",)),
    )(x_flat, eps, w1_bf16, b1, emb_pad, w2_bf16, b2)

    # drop the padded classes, restore (B, num_classes) — wrapper-side layout only
    return out.reshape(bsz, NC_PAD)[:, :NUM_CLASSES]


# ---------------------------------------------------------------------------
# Deterministic parameters + pure-JAX reference (same bf16 operand casts)
# ---------------------------------------------------------------------------
def make_params(key):
    k1, k2, k3 = jax.random.split(key, 3)
    w1 = (jax.random.normal(k1, (D, HID), jnp.float32) * (1.0 / math.sqrt(D))
          ).astype(jnp.bfloat16)
    b1 = jnp.zeros((1, HID), jnp.float32)
    emb = jax.random.normal(k2, (NUM_CLASSES, HID), jnp.float32) * 0.1
    w2 = (jax.random.normal(k3, (HID, D), jnp.float32) * (1.0 / math.sqrt(HID))
          ).astype(jnp.bfloat16)
    b2 = jnp.zeros((1, D), jnp.float32)
    return w1, b1, emb, w2, b2


def reference_forward(x_nchw, eps, w1_bf16, b1, emb, w2_bf16, b2):
    x_flat = x_nchw.reshape(x_nchw.shape[0], D).astype(jnp.float32)
    x0 = (x_flat - 0.5) * 2.0
    x_t = SQRT_AB * x0 + SQRT_1MAB * eps
    h_base = jnp.dot(x_t.astype(jnp.bfloat16), w1_bf16,
                     preferred_element_type=jnp.float32) + b1
    h = h_base[:, None, :] + emb[None, :, :]
    h = h * jax.nn.sigmoid(h)
    eps_hat = jnp.einsum('bch,hd->bcd', h.astype(jnp.bfloat16), w2_bf16,
                         preferred_element_type=jnp.float32) + b2
    diff = eps_hat - eps[:, None, :]
    return -jnp.mean(diff * diff, axis=-1)


if __name__ == "__main__":
    key = jax.random.PRNGKey(0)
    k_x, k_eps, k_params = jax.random.split(key, 3)

    # input image batch in [0, 1], PyTorch NCHW layout
    x = jax.random.uniform(k_x, (B, C, H, W), jnp.float32)

    # share_noise: one epsilon per instance, reused across all classes
    eps = jax.random.normal(k_eps, (B, D), jnp.float32)

    w1, b1, emb, w2, b2 = make_params(k_params)

    out = diffusion_classifier_forward(x, eps, w1, b1, emb, w2, b2)
    out = jax.block_until_ready(out)

    assert out.shape == (B, NUM_CLASSES) and out.dtype == jnp.float32
    assert bool(jnp.all(jnp.isfinite(out)))

    ref = reference_forward(x, eps, w1, b1, emb, w2, b2)
    assert bool(jnp.allclose(out, ref, rtol=2e-2, atol=2e-3))

    print("KERNEL_OK")
</pallas_src>

<mosaic_0001>
module attributes {stable_mosaic.version = 11 : i64} {
  func.func @diffusion_classifier_kernel(%arg0: i32, %arg1: memref<2x1024xf32, #tpu.memory_space<vmem>>, %arg2: memref<2x1024xf32, #tpu.memory_space<vmem>>, %arg3: memref<1024x256xbf16, #tpu.memory_space<vmem>>, %arg4: memref<1x256xf32, #tpu.memory_space<vmem>>, %arg5: memref<16x256xf32, #tpu.memory_space<vmem>>, %arg6: memref<256x1024xbf16, #tpu.memory_space<vmem>>, %arg7: memref<1x1024xf32, #tpu.memory_space<vmem>>, %arg8: memref<32x1xf32, #tpu.memory_space<vmem>>) attributes {dimension_semantics = [#tpu.dimension_semantics<parallel>], iteration_bounds = array<i64: 1>, scalar_prefetch = 0 : i64, scratch_operands = 0 : i64, tpu.core_type = #tpu.core_type<tc>, window_params = [{transform_indices = @transform_0, window_bounds = array<i64: 2, 1024>}, {transform_indices = @transform_1, window_bounds = array<i64: 2, 1024>}, {pipeline_mode = #tpu.pipeline_mode<synchronous>, transform_indices = @transform_2, window_bounds = array<i64: 1024, 256>}, {pipeline_mode = #tpu.pipeline_mode<synchronous>, transform_indices = @transform_3, window_bounds = array<i64: 1, 256>}, {pipeline_mode = #tpu.pipeline_mode<synchronous>, transform_indices = @transform_4, window_bounds = array<i64: 16, 256>}, {pipeline_mode = #tpu.pipeline_mode<synchronous>, transform_indices = @transform_5, window_bounds = array<i64: 256, 1024>}, {pipeline_mode = #tpu.pipeline_mode<synchronous>, transform_indices = @transform_6, window_bounds = array<i64: 1, 1024>}, {transform_indices = @transform_7, window_bounds = array<i64: 32, 1>}]} {
    %c0 = arith.constant 0 : index
    %c0_0 = arith.constant 0 : index
    %0 = vector.load %arg2[%c0, %c0_0] : memref<2x1024xf32, #tpu.memory_space<vmem>>, vector<2x1024xf32>
    %c0_1 = arith.constant 0 : index
    %c0_2 = arith.constant 0 : index
    %1 = vector.load %arg1[%c0_1, %c0_2] : memref<2x1024xf32, #tpu.memory_space<vmem>>, vector<2x1024xf32>
    %cst = arith.constant 1.41421354 : f32
    %2 = vector.broadcast %cst : f32 to vector<2x1024xf32>
    %3 = arith.mulf %2, %1 : vector<2x1024xf32>
    %cst_3 = arith.constant -0.707106769 : f32
    %4 = vector.broadcast %cst_3 : f32 to vector<2x1024xf32>
    %5 = arith.addf %3, %4 : vector<2x1024xf32>
    %cst_4 = arith.constant 0.707106769 : f32
    %6 = vector.broadcast %cst_4 : f32 to vector<2x1024xf32>
    %7 = arith.mulf %6, %0 : vector<2x1024xf32>
    %8 = arith.addf %5, %7 : vector<2x1024xf32>
    %9 = arith.truncf %8 : vector<2x1024xf32> to vector<2x1024xbf16>
    %c0_5 = arith.constant 0 : index
    %c0_6 = arith.constant 0 : index
    %10 = vector.load %arg3[%c0_5, %c0_6] : memref<1024x256xbf16, #tpu.memory_space<vmem>>, vector<1024x256xbf16>
    %cst_7 = arith.constant dense<0.000000e+00> : vector<2x256xf32>
    %11 = tpu.matmul %9, %10, %cst_7 {dimension_numbers = #tpu.dot_dimension_numbers<[1], [0], [0], [1], [0, 0, 1, 1], [], []>} : vector<2x1024xbf16>, vector<1024x256xbf16>, vector<2x256xf32> -> vector<2x256xf32>
    %c0_8 = arith.constant 0 : index
    %c0_9 = arith.constant 0 : index
    %12 = vector.load %arg4[%c0_8, %c0_9] : memref<1x256xf32, #tpu.memory_space<vmem>>, vector<1x256xf32>
    %13 = vector.broadcast %12 : vector<1x256xf32> to vector<2x256xf32>
    %14 = arith.addf %11, %13 : vector<2x256xf32>
    %15 = vector.shape_cast %14 : vector<2x256xf32> to vector<2x1x256xf32>
    %c0_10 = arith.constant 0 : index
    %c0_11 = arith.constant 0 : index
    %16 = vector.load %arg5[%c0_10, %c0_11] : memref<16x256xf32, #tpu.memory_space<vmem>>, vector<16x256xf32>
    %17 = vector.shape_cast %16 : vector<16x256xf32> to vector<1x16x256xf32>
    %18 = vector.broadcast %15 : vector<2x1x256xf32> to vector<2x16x256xf32>
    %19 = vector.broadcast %17 : vector<1x16x256xf32> to vector<2x16x256xf32>
    %20 = arith.addf %18, %19 : vector<2x16x256xf32>
    %21 = arith.negf %20 : vector<2x16x256xf32>
    %22 = math.exp %21 : vector<2x16x256xf32>
    %cst_12 = arith.constant 1.000000e+00 : f32
    %23 = vector.broadcast %cst_12 : f32 to vector<2x16x256xf32>
    %24 = arith.addf %23, %22 : vector<2x16x256xf32>
    %25 = arith.divf %23, %24 : vector<2x16x256xf32>
    %26 = arith.mulf %20, %25 : vector<2x16x256xf32>
    %27 = vector.shape_cast %26 : vector<2x16x256xf32> to vector<32x256xf32>
    %28 = arith.truncf %27 : vector<32x256xf32> to vector<32x256xbf16>
    %c0_13 = arith.constant 0 : index
    %c0_14 = arith.constant 0 : index
    %29 = vector.load %arg6[%c0_13, %c0_14] : memref<256x1024xbf16, #tpu.memory_space<vmem>>, vector<256x1024xbf16>
    %cst_15 = arith.constant dense<0.000000e+00> : vector<32x1024xf32>
    %30 = tpu.matmul %28, %29, %cst_15 {dimension_numbers = #tpu.dot_dimension_numbers<[1], [0], [0], [1], [0, 0, 1, 1], [], []>} : vector<32x256xbf16>, vector<256x1024xbf16>, vector<32x1024xf32> -> vector<32x1024xf32>
    %c0_16 = arith.constant 0 : index
    %c0_17 = arith.constant 0 : index
    %31 = vector.load %arg7[%c0_16, %c0_17] : memref<1x1024xf32, #tpu.memory_space<vmem>>, vector<1x1024xf32>
    %32 = vector.broadcast %31 : vector<1x1024xf32> to vector<2x1024xf32>
    %33 = arith.subf %32, %0 : vector<2x1024xf32>
    %34 = vector.shape_cast %33 : vector<2x1024xf32> to vector<2x1x1024xf32>
    %35 = vector.shape_cast %34 : vector<2x1x1024xf32> to vector<2x1x1024xf32>
    %36 = vector.broadcast %35 : vector<2x1x1024xf32> to vector<2x16x1024xf32>
    %37 = vector.shape_cast %36 : vector<2x16x1024xf32> to vector<32x1024xf32>
    %38 = arith.addf %30, %37 : vector<32x1024xf32>
    %39 = arith.mulf %38, %38 : vector<32x1024xf32>
    %cst_18 = arith.constant dense<0.000000e+00> : vector<32xf32>
    %40 = vector.multi_reduction <add>, %39, %cst_18 [1] : vector<32x1024xf32> to vector<32xf32>
    %41 = vector.shape_cast %40 : vector<32xf32> to vector<32x1xf32>
    %cst_19 = arith.constant -9.765625E-4 : f32
    %42 = vector.broadcast %cst_19 : f32 to vector<32x1xf32>
    %43 = arith.mulf %41, %42 : vector<32x1xf32>
    %c0_20 = arith.constant 0 : index
    %c0_21 = arith.constant 0 : index
    %44 = vector.load %arg8[%c0_20, %c0_21] : memref<32x1xf32, #tpu.memory_space<vmem>>, vector<32x1xf32>
    tpu.vector_store %arg8[%c0_20, %c0_21], %43 {strides = array<i32>} : memref<32x1xf32, #tpu.memory_space<vmem>>, vector<32x1xf32>,
    return
  }
  func.func @transform_0(%arg0: i32) -> (i32, i32) {
    %c0_i32 = arith.constant 0 : i32
    %c0_i32_0 = arith.constant 0 : i32
    return %arg0, %c0_i32 : i32, i32
  }
  func.func @transform_1(%arg0: i32) -> (i32, i32) {
    %c0_i32 = arith.constant 0 : i32
    %c0_i32_0 = arith.constant 0 : i32
    return %arg0, %c0_i32 : i32, i32
  }
  func.func @transform_2(%arg0: i32) -> (i32, i32) {
    %c0_i32 = arith.constant 0 : i32
    %c0_i32_0 = arith.constant 0 : i32
    %c0_i32_1 = arith.constant 0 : i32
    return %c0_i32, %c0_i32_0 : i32, i32
  }
  func.func @transform_3(%arg0: i32) -> (i32, i32) {
    %c0_i32 = arith.constant 0 : i32
    %c0_i32_0 = arith.constant 0 : i32
    %c0_i32_1 = arith.constant 0 : i32
    return %c0_i32, %c0_i32_0 : i32, i32
  }
  func.func @transform_4(%arg0: i32) -> (i32, i32) {
    %c0_i32 = arith.constant 0 : i32
    %c0_i32_0 = arith.constant 0 : i32
    %c0_i32_1 = arith.constant 0 : i32
    return %c0_i32, %c0_i32_0 : i32, i32
  }
  func.func @transform_5(%arg0: i32) -> (i32, i32) {
    %c0_i32 = arith.constant 0 : i32
    %c0_i32_0 = arith.constant 0 : i32
    %c0_i32_1 = arith.constant 0 : i32
    return %c0_i32, %c0_i32_0 : i32, i32
  }
  func.func @transform_6(%arg0: i32) -> (i32, i32) {
    %c0_i32 = arith.constant 0 : i32
    %c0_i32_0 = arith.constant 0 : i32
    %c0_i32_1 = arith.constant 0 : i32
    return %c0_i32, %c0_i32_0 : i32, i32
  }
  func.func @transform_7(%arg0: i32) -> (i32, i32) {
    %c0_i32 = arith.constant 0 : i32
    %c0_i32_0 = arith.constant 0 : i32
    return %arg0, %c0_i32 : i32, i32
  }
}

</mosaic_0001>

<llo_original>
// kernel: tpu_custom_call.1
$region0: #{tpu_custom_call.1}
  #allocation0 [shape = 'u32[]', space=smem, size = 0x4, offset = 0x4, fixed_abs, tag = 'smem constant byte address 0x4 - core index']
  #allocation1 [shape = 'u32[72,128]{1,0:T(1,128)}', space=vmem, size = 0x9000, scoped, tag = 'internal scratch']
  %s0 = inlined_call_operand.hbm [shape: f32[2,1024], index: 0, kind: input, shape index: {}]
  %s1 = inlined_call_operand.hbm [shape: f32[2,1024], index: 1, kind: input, shape index: {}]
  %s2 = inlined_call_operand.hbm [shape: bf16[1024,256], index: 2, kind: input, shape index: {}]
  %s3 = inlined_call_operand.vmem [shape: f32[1,256], index: 3, kind: input, shape index: {}]
  %s4 = inlined_call_operand.hbm [shape: f32[16,256], index: 4, kind: input, shape index: {}]
  %s5 = inlined_call_operand.hbm [shape: bf16[256,1024], index: 5, kind: input, shape index: {}]
  %s6 = inlined_call_operand.hbm [shape: f32[1,1024], index: 6, kind: input, shape index: {}]
  %s7 = inlined_call_operand.vmem [shape: f32[32,1], index: 7, kind: output, shape index: {}]
  %s8 = sld [smem:[#allocation0]]
  $region62: #{tpu_custom_call.1} parent=0
    _
  %s10 = ssub.s32 1, %s8
  %s11 = scalar_select 0, %s10, %s8
  $region1: #{tpu_custom_call.1} parent=0
    #allocation2 [shape = 'u8[8192]{0}', space=vmem, size = 0x2000, scoped, tag = 'input window, operand 0, single buffered']
    #allocation3 [shape = 's32[1]{0}', space=sflag, size = 0x4, scoped, tag = 'scoped memory for tpu_custom_call.1']
    #allocation4 [shape = 'u8[8192]{0}', space=vmem, size = 0x2000, scoped, tag = 'input window, operand 1, single buffered']
    #allocation5 [shape = 's32[1]{0}', space=sflag, size = 0x4, scoped, tag = 'scoped memory for tpu_custom_call.1']
    #allocation6 [shape = 'u8[524288]{0}', space=vmem, size = 0x80000, scoped, tag = 'input window, operand 2, single buffered']
    #allocation7 [shape = 'u8[16384]{0}', space=vmem, size = 0x4000, scoped, tag = 'input window, operand 4, single buffered']
    #allocation8 [shape = 's32[1]{0}', space=sflag, size = 0x4, scoped, tag = 'scoped memory for tpu_custom_call.1']
    #allocation9 [shape = 'u8[524288]{0}', space=vmem, size = 0x80000, scoped, tag = 'input window, operand 5, single buffered']
    #allocation10 [shape = 'u8[4096]{0}', space=vmem, size = 0x1000, scoped, tag = 'input window, operand 6, single buffered']
    #allocation11 [shape = 's32[1]{0}', space=sflag, size = 0x4, scoped, tag = 'scoped memory for tpu_custom_call.1']
    %12 = vsyncpa [#allocation3], 0
    %13 = vsyncpa [#allocation5], 0
    %14 = vsyncpa [#allocation8], 0
    %15 = vsyncpa [#allocation11], 0
    // Predicated region
    $region2: #{tpu_custom_call.1} parent=1 // pred_check
      _
    $region3: #{tpu_custom_call.1} parent=1 // pred_check_branch
      %17 = sbr.rel (0) target = $region5
    $region4: #{tpu_custom_call.1} parent=1 // pred_region
      %19 = vsyncadd [#allocation3], 0
      %s21 = sshll.u32 %s0, 4
      %s22 = int_to_ptr.hbm [resolvable:$true] %s21
      %s23 = sshll.u32 [#allocation2], 4
      %s24 = int_to_ptr.vmem [resolvable:$true] %s23
      %26 = dma.hbm_to_vmem [thread:$0]  %s22, 256, %s24, [#allocation3]
    $region5: #{tpu_custom_call.1} parent=1 // pred_fallthru
      _
    // Predicated region
    $region6: #{tpu_custom_call.1} parent=1 // pred_check
      _
    $region7: #{tpu_custom_call.1} parent=1 // pred_check_branch
      %28 = sbr.rel (0) target = $region9
    $region8: #{tpu_custom_call.1} parent=1 // pred_region
      %30 = vsyncadd [#allocation5], 0
      %s32 = sshll.u32 %s1, 4
      %s33 = int_to_ptr.hbm [resolvable:$true] %s32
      %s34 = sshll.u32 [#allocation4], 4
      %s35 = int_to_ptr.vmem [resolvable:$true] %s34
      %37 = dma.hbm_to_vmem [thread:$0]  %s33, 256, %s35, [#allocation5]
    $region9: #{tpu_custom_call.1} parent=1 // pred_fallthru
      _
    // Predicated region
    $region10: #{tpu_custom_call.1} parent=1 // pred_check
      _
    $region11: #{tpu_custom_call.1} parent=1 // pred_check_branch
      %39 = sbr.rel (0) target = $region13
    $region12: #{tpu_custom_call.1} parent=1 // pred_region
      %41 = vsyncadd [#allocation5], 0
      %s42 = sshll.u32 %s2, 4
      %s43 = int_to_ptr.hbm [resolvable:$true] %s42
      %s44 = sshll.u32 [#allocation6], 4
      %s45 = int_to_ptr.vmem [resolvable:$true] %s44
      %50 = dma.hbm_to_vmem [thread:$0]  %s43, 16384, %s45, [#allocation5], 128, 128, 8
    $region13: #{tpu_custom_call.1} parent=1 // pred_fallthru
      _
    // Predicated region
    $region14: #{tpu_custom_call.1} parent=1 // pred_check
      _
    $region15: #{tpu_custom_call.1} parent=1 // pred_check_branch
      %52 = sbr.rel (0) target = $region17
    $region16: #{tpu_custom_call.1} parent=1 // pred_region
      _
    $region17: #{tpu_custom_call.1} parent=1 // pred_fallthru
      _
    // Predicated region
    $region18: #{tpu_custom_call.1} parent=1 // pred_check
      _
    $region19: #{tpu_custom_call.1} parent=1 // pred_check_branch
      %54 = sbr.rel (0) target = $region21
    $region20: #{tpu_custom_call.1} parent=1 // pred_region
      %56 = vsyncadd [#allocation8], 0
      %s57 = sshll.u32 %s4, 4
      %s58 = int_to_ptr.hbm [resolvable:$true] %s57
      %s59 = sshll.u32 [#allocation7], 4
      %s60 = int_to_ptr.vmem [resolvable:$true] %s59
      %65 = dma.hbm_to_vmem [thread:$0]  %s58, 512, %s60, [#allocation8], 256, 256, 16
    $region21: #{tpu_custom_call.1} parent=1 // pred_fallthru
      _
    // Predicated region
    $region22: #{tpu_custom_call.1} parent=1 // pred_check
      _
    $region23: #{tpu_custom_call.1} parent=1 // pred_check_branch
      %67 = sbr.rel (0) target = $region25
    $region24: #{tpu_custom_call.1} parent=1 // pred_region
      %69 = vsyncadd [#allocation8], 0
      %s70 = sshll.u32 %s5, 4
      %s71 = int_to_ptr.hbm [resolvable:$true] %s70
      %s72 = sshll.u32 [#allocation9], 4
      %s73 = int_to_ptr.vmem [resolvable:$true] %s72
      %78 = dma.hbm_to_vmem [thread:$0]  %s71, 16384, %s73, [#allocation8], 512, 512, 32
    $region25: #{tpu_custom_call.1} parent=1 // pred_fallthru
      _
    // Predicated region
    $region26: #{tpu_custom_call.1} parent=1 // pred_check
      _
    $region27: #{tpu_custom_call.1} parent=1 // pred_check_branch
      %80 = sbr.rel (0) target = $region29
    $region28: #{tpu_custom_call.1} parent=1 // pred_region
      %82 = vsyncadd [#allocation11], 0
      %s84 = sshll.u32 %s6, 4
      %s85 = int_to_ptr.hbm [resolvable:$true] %s84
      %s86 = sshll.u32 [#allocation10], 4
      %s87 = int_to_ptr.vmem [resolvable:$true] %s86
      %89 = dma.hbm_to_vmem [thread:$0]  %s85, 128, %s87, [#allocation11]
    $region29: #{tpu_custom_call.1} parent=1 // pred_fallthru
      _
    // Predicated region
    $region30: #{tpu_custom_call.1} parent=1 // pred_check
      _
    $region31: #{tpu_custom_call.1} parent=1 // pred_check_branch
      %91 = sbr.rel (0) target = $region33
    $region32: #{tpu_custom_call.1} parent=1 // pred_region
      %93 = dma.done [#allocation3], 256
    $region33: #{tpu_custom_call.1} parent=1 // pred_fallthru
      _
    // Predicated region
    $region34: #{tpu_custom_call.1} parent=1 // pred_check
      _
    $region35: #{tpu_custom_call.1} parent=1 // pred_check_branch
      %95 = sbr.rel (0) target = $region37
    $region36: #{tpu_custom_call.1} parent=1 // pred_region
      %97 = dma.done [#allocation5], 256
    $region37: #{tpu_custom_call.1} parent=1 // pred_fallthru
      _
    // Predicated region
    $region38: #{tpu_custom_call.1} parent=1 // pred_check
      _
    $region39: #{tpu_custom_call.1} parent=1 // pred_check_branch
      %99 = sbr.rel (0) target = $region41
    $region40: #{tpu_custom_call.1} parent=1 // pred_region
      %101 = dma.done [#allocation5], 16384
    $region41: #{tpu_custom_call.1} parent=1 // pred_fallthru
      _
    // Predicated region
    $region42: #{tpu_custom_call.1} parent=1 // pred_check
      _
    $region43: #{tpu_custom_call.1} parent=1 // pred_check_branch
      %103 = sbr.rel (0) target = $region45
    $region44: #{tpu_custom_call.1} parent=1 // pred_region
      %105 = dma.done [#allocation8], 512
    $region45: #{tpu_custom_call.1} parent=1 // pred_fallthru
      _
    // Predicated region
    $region46: #{tpu_custom_call.1} parent=1 // pred_check
      _
    $region47: #{tpu_custom_call.1} parent=1 // pred_check_branch
      %107 = sbr.rel (0) target = $region49
    $region48: #{tpu_custom_call.1} parent=1 // pred_region
      %109 = dma.done [#allocation8], 16384
    $region49: #{tpu_custom_call.1} parent=1 // pred_fallthru
      _
    // Predicated region
    $region50: #{tpu_custom_call.1} parent=1 // pred_check
      _
    $region51: #{tpu_custom_call.1} parent=1 // pred_check_branch
      %111 = sbr.rel (0) target = $region53
    $region52: #{tpu_custom_call.1} parent=1 // pred_region
      %113 = dma.done [#allocation11], 128
    $region53: #{tpu_custom_call.1} parent=1 // pred_fallthru
      _
    %v114 = vld [vmem:[#allocation4] sm:$0xff]
    %v115 = vld [vmem:[#allocation4 + $0x8] sm:$0xff]
    %v116 = vld [vmem:[#allocation2] sm:$0xff]
    %v117 = vld [vmem:[#allocation2 + $0x8] sm:$0xff]
    %v118 = vmul.f32 %v116, 1.4142135
    %v119 = vmul.f32 %v117, 1.4142135
    %v120 = vadd.f32 %v118, -0.70710677
    %v121 = vadd.f32 %v119, -0.70710677
    %v122 = vmul.f32 %v114, 0.70710677
    %v123 = vmul.f32 %v115, 0.70710677
    %v124 = vadd.f32 %v120, %v122
    %v125 = vadd.f32 %v121, %v123
    %128 = vst [vmem:[#allocation1] ss:$4 sm:$0xff] %v124
    %s129 = scalar_lea.vmem [#allocation1], 32
    %130 = vst [vmem:[%s129] ss:$4 sm:$0xff] %v125
    %v131 = vld.sshfl [vmem:[#allocation1] sm:$0xff pattern:$0x73625140]
    %v132 = vld.sshfl [vmem:[#allocation1 + $0x8] sm:$0xff pattern:$0x73625140]
    %v133 = vld.sshfl [vmem:[#allocation1 + $0x10] sm:$0xff pattern:$0x73625140]
    %v134 = vld.sshfl [vmem:[#allocation1 + $0x18] sm:$0xff pattern:$0x73625140]
    %v135 = vld.sshfl [vmem:[#allocation1 + $0x20] sm:$0xff pattern:$0x73625140]
    %v136 = vld.sshfl [vmem:[#allocation1 + $0x28] sm:$0xff pattern:$0x73625140]
    %v137 = vld.sshfl [vmem:[#allocation1 + $0x30] sm:$0xff pattern:$0x73625140]
    %v138 = vld.sshfl [vmem:[#allocation1 + $0x38] sm:$0xff pattern:$0x73625140]
    %v147 = vpack.c.bf16 %v131, %v131
    %v148 = vpack.c.bf16 %v132, %v132
    %v149 = vpack.c.bf16 %v133, %v133
    %v150 = vpack.c.bf16 %v134, %v134
    %v151 = vpack.c.bf16 %v135, %v135
    %v152 = vpack.c.bf16 %v136, %v136
    %v153 = vpack.c.bf16 %v137, %v137
    %v154 = vpack.c.bf16 %v138, %v138
    %v155 = vld [vmem:[#allocation6] sm:$0xff]
    %v156 = vld [vmem:[#allocation6 + $0x8] sm:$0xff]
    %v157 = vld [vmem:[#allocation6 + $0x10] sm:$0xff]
    %v158 = vld [vmem:[#allocation6 + $0x18] sm:$0xff]
    %v159 = vld [vmem:[#allocation6 + $0x20] sm:$0xff]
    %v160 = vld [vmem:[#allocation6 + $0x28] sm:$0xff]
    %v161 = vld [vmem:[#allocation6 + $0x30] sm:$0xff]
    %v162 = vld [vmem:[#allocation6 + $0x38] sm:$0xff]
    %v163 = vld [vmem:[#allocation6 + $0x40] sm:$0xff]
    %v164 = vld [vmem:[#allocation6 + $0x48] sm:$0xff]
    %v165 = vld [vmem:[#allocation6 + $0x50] sm:$0xff]
    %v166 = vld [vmem:[#allocation6 + $0x58] sm:$0xff]
    %v167 = vld [vmem:[#allocation6 + $0x60] sm:$0xff]
    %v168 = vld [vmem:[#allocation6 + $0x68] sm:$0xff]
    %v169 = vld [vmem:[#allocation6 + $0x70] sm:$0xff]
    %v170 = vld [vmem:[#allocation6 + $0x78] sm:$0xff]
    %v171 = vld [vmem:[#allocation6 + $0x80] sm:$0xff]
    %v172 = vld [vmem:[#allocation6 + $0x88] sm:$0xff]
    %v173 = vld [vmem:[#allocation6 + $0x90] sm:$0xff]
    %v174 = vld [vmem:[#allocation6 + $0x98] sm:$0xff]
    %v175 = vld [vmem:[#allocation6 + $0xa0] sm:$0xff]
    %v176 = vld [vmem:[#allocation6 + $0xa8] sm:$0xff]
    %v177 = vld [vmem:[#allocation6 + $0xb0] sm:$0xff]
    %v178 = vld [vmem:[#allocation6 + $0xb8] sm:$0xff]
    %v179 = vld [vmem:[#allocation6 + $0xc0] sm:$0xff]
    %v180 = vld [vmem:[#allocation6 + $0xc8] sm:$0xff]
    %v181 = vld [vmem:[#allocation6 + $0xd0] sm:$0xff]
    %v182 = vld [vmem:[#allocation6 + $0xd8] sm:$0xff]
    %v183 = vld [vmem:[#allocation6 + $0xe0] sm:$0xff]
    %v184 = vld [vmem:[#allocation6 + $0xe8] sm:$0xff]
    %v185 = vld [vmem:[#allocation6 + $0xf0] sm:$0xff]
    %v186 = vld [vmem:[#allocation6 + $0xf8] sm:$0xff]
    %v187 = vld [vmem:[#allocation6 + $0x100] sm:$0xff]
    %v188 = vld [vmem:[#allocation6 + $0x108] sm:$0xff]
    %v189 = vld [vmem:[#allocation6 + $0x110] sm:$0xff]
    %v190 = vld [vmem:[#allocation6 + $0x118] sm:$0xff]
    %v191 = vld [vmem:[#allocation6 + $0x120] sm:$0xff]
    %v192 = vld [vmem:[#allocation6 + $0x128] sm:$0xff]
    %v193 = vld [vmem:[#allocation6 + $0x130] sm:$0xff]
    %v194 = vld [vmem:[#allocation6 + $0x138] sm:$0xff]
    %v195 = vld [vmem:[#allocation6 + $0x140] sm:$0xff]
    %v196 = vld [vmem:[#allocation6 + $0x148] sm:$0xff]
    %v197 = vld [vmem:[#allocation6 + $0x150] sm:$0xff]
    %v198 = vld [vmem:[#allocation6 + $0x158] sm:$0xff]
    %v199 = vld [vmem:[#allocation6 + $0x160] sm:$0xff]
    %v200 = vld [vmem:[#allocation6 + $0x168] sm:$0xff]
    %v201 = vld [vmem:[#allocation6 + $0x170] sm:$0xff]
    %v202 = vld [vmem:[#allocation6 + $0x178] sm:$0xff]
    %v203 = vld [vmem:[#allocation6 + $0x180] sm:$0xff]
    %v204 = vld [vmem:[#allocation6 + $0x188] sm:$0xff]
    %v205 = vld [vmem:[#allocation6 + $0x190] sm:$0xff]
    %v206 = vld [vmem:[#allocation6 + $0x198] sm:$0xff]
    %v207 = vld [vmem:[#allocation6 + $0x1a0] sm:$0xff]
    %v208 = vld [vmem:[#allocation6 + $0x1a8] sm:$0xff]
    %v209 = vld [vmem:[#allocation6 + $0x1b0] sm:$0xff]
    %v210 = vld [vmem:[#allocation6 + $0x1b8] sm:$0xff]
    %v211 = vld [vmem:[#allocation6 + $0x1c0] sm:$0xff]
    %v212 = vld [vmem:[#allocation6 + $0x1c8] sm:$0xff]
    %v213 = vld [vmem:[#allocation6 + $0x1d0] sm:$0xff]
    %v214 = vld [vmem:[#allocation6 + $0x1d8] sm:$0xff]
    %v215 = vld [vmem:[#allocation6 + $0x1e0] sm:$0xff]
    %v216 = vld [vmem:[#allocation6 + $0x1e8] sm:$0xff]
    %v217 = vld [vmem:[#allocation6 + $0x1f0] sm:$0xff]
    %v218 = vld [vmem:[#allocation6 + $0x1f8] sm:$0xff]
    %v219 = vld [vmem:[#allocation6 + $0x200] sm:$0xff]
    %v220 = vld [vmem:[#allocation6 + $0x208] sm:$0xff]
    %v221 = vld [vmem:[#allocation6 + $0x210] sm:$0xff]
    %v222 = vld [vmem:[#allocation6 + $0x218] sm:$0xff]
    %v223 = vld [vmem:[#allocation6 + $0x220] sm:$0xff]
    %v224 = vld [vmem:[#allocation6 + $0x228] sm:$0xff]
    %v225 = vld [vmem:[#allocation6 + $0x230] sm:$0xff]
    %v226 = vld [vmem:[#allocation6 + $0x238] sm:$0xff]
    %v227 = vld [vmem:[#allocation6 + $0x240] sm:$0xff]
    %v228 = vld [vmem:[#allocation6 + $0x248] sm:$0xff]
    %v229 = vld [vmem:[#allocation6 + $0x250] sm:$0xff]
    %v230 = vld [vmem:[#allocation6 + $0x258] sm:$0xff]
    %v231 = vld [vmem:[#allocation6 + $0x260] sm:$0xff]
    %v232 = vld [vmem:[#allocation6 + $0x268] sm:$0xff]
    %v233 = vld [vmem:[#allocation6 + $0x270] sm:$0xff]
    %v234 = vld [vmem:[#allocation6 + $0x278] sm:$0xff]
    %v235 = vld [vmem:[#allocation6 + $0x280] sm:$0xff]
    %v236 = vld [vmem:[#allocation6 + $0x288] sm:$0xff]
    %v237 = vld [vmem:[#allocation6 + $0x290] sm:$0xff]
    %v238 = vld [vmem:[#allocation6 + $0x298] sm:$0xff]
    %v239 = vld [vmem:[#allocation6 + $0x2a0] sm:$0xff]
    %v240 = vld [vmem:[#allocation6 + $0x2a8] sm:$0xff]
    %v241 = vld [vmem:[#allocation6 + $0x2b0] sm:$0xff]
    %v242 = vld [vmem:[#allocation6 + $0x2b8] sm:$0xff]
    %v243 = vld [vmem:[#allocation6 + $0x2c0] sm:$0xff]
    %v244 = vld [vmem:[#allocation6 + $0x2c8] sm:$0xff]
    %v245 = vld [vmem:[#allocation6 + $0x2d0] sm:$0xff]
    %v246 = vld [vmem:[#allocation6 + $0x2d8] sm:$0xff]
    %v247 = vld [vmem:[#allocation6 + $0x2e0] sm:$0xff]
    %v248 = vld [vmem:[#allocation6 + $0x2e8] sm:$0xff]
    %v249 = vld [vmem:[#allocation6 + $0x2f0] sm:$0xff]
    %v250 = vld [vmem:[#allocation6 + $0x2f8] sm:$0xff]
    %v251 = vld [vmem:[#allocation6 + $0x300] sm:$0xff]
    %v252 = vld [vmem:[#allocation6 + $0x308] sm:$0xff]
    %v253 = vld [vmem:[#allocation6 + $0x310] sm:$0xff]
    %v254 = vld [vmem:[#allocation6 + $0x318] sm:$0xff]
    %v255 = vld [vmem:[#allocation6 + $0x320] sm:$0xff]
    %v256 = vld [vmem:[#allocation6 + $0x328] sm:$0xff]
    %v257 = vld [vmem:[#allocation6 + $0x330] sm:$0xff]
    %v258 = vld [vmem:[#allocation6 + $0x338] sm:$0xff]
    %v259 = vld [vmem:[#allocation6 + $0x340] sm:$0xff]
    %v260 = vld [vmem:[#allocation6 + $0x348] sm:$0xff]
    %v261 = vld [vmem:[#allocation6 + $0x350] sm:$0xff]
    %v262 = vld [vmem:[#allocation6 + $0x358] sm:$0xff]
    %v263 = vld [vmem:[#allocation6 + $0x360] sm:$0xff]
    %v264 = vld [vmem:[#allocation6 + $0x368] sm:$0xff]
    %v265 = vld [vmem:[#allocation6 + $0x370] sm:$0xff]
    %v266 = vld [vmem:[#allocation6 + $0x378] sm:$0xff]
    %v267 = vld [vmem:[#allocation6 + $0x380] sm:$0xff]
    %v268 = vld [vmem:[#allocation6 + $0x388] sm:$0xff]
    %v269 = vld [vmem:[#allocation6 + $0x390] sm:$0xff]
    %v270 = vld [vmem:[#allocation6 + $0x398] sm:$0xff]
    %v271 = vld [vmem:[#allocation6 + $0x3a0] sm:$0xff]
    %v272 = vld [vmem:[#allocation6 + $0x3a8] sm:$0xff]
    %v273 = vld [vmem:[#allocation6 + $0x3b0] sm:$0xff]
    %v274 = vld [vmem:[#allocation6 + $0x3b8] sm:$0xff]
    %v275 = vld [vmem:[#allocation6 + $0x3c0] sm:$0xff]
    %v276 = vld [vmem:[#allocation6 + $0x3c8] sm:$0xff]
    %v277 = vld [vmem:[#allocation6 + $0x3d0] sm:$0xff]
    %v278 = vld [vmem:[#allocation6 + $0x3d8] sm:$0xff]
    %v279 = vld [vmem:[#allocation6 + $0x3e0] sm:$0xff]
    %v280 = vld [vmem:[#allocation6 + $0x3e8] sm:$0xff]
    %v281 = vld [vmem:[#allocation6 + $0x3f0] sm:$0xff]
    %v282 = vld [vmem:[#allocation6 + $0x3f8] sm:$0xff]
    %v283 = vld [vmem:[%s3] sm:$0x3]
    %v285 = vperm.slane %v283, 0
    %v286 = vperm.slane %v283, 1
    %v417 = vunpack.c.l.b16 %v155
    %v418 = vunpack.c.h.b16 %v155
    %v419 = vunpack.c.l.b16 %v156
    %v420 = vunpack.c.h.b16 %v156
    %v421 = vunpack.c.l.b16 %v157
    %v422 = vunpack.c.h.b16 %v157
    %v423 = vunpack.c.l.b16 %v158
    %v424 = vunpack.c.h.b16 %v158
    %v425 = vunpack.c.l.b16 %v159
    %v426 = vunpack.c.h.b16 %v159
    %v427 = vunpack.c.l.b16 %v160
    %v428 = vunpack.c.h.b16 %v160
    %v429 = vunpack.c.l.b16 %v161
    %v430 = vunpack.c.h.b16 %v161
    %v431 = vunpack.c.l.b16 %v162
    %v432 = vunpack.c.h.b16 %v162
    %v433 = vunpack.c.l.b16 %v163
    %v434 = vunpack.c.h.b16 %v163
    %v435 = vunpack.c.l.b16 %v164
    %v436 = vunpack.c.h.b16 %v164
    %v437 = vunpack.c.l.b16 %v165
    %v438 = vunpack.c.h.b16 %v165
    %v439 = vunpack.c.l.b16 %v166
    %v440 = vunpack.c.h.b16 %v166
    %v441 = vunpack.c.l.b16 %v167
    %v442 = vunpack.c.h.b16 %v167
    %v443 = vunpack.c.l.b16 %v168
    %v444 = vunpack.c.h.b16 %v168
    %v445 = vunpack.c.l.b16 %v169
    %v446 = vunpack.c.h.b16 %v169
    %v447 = vunpack.c.l.b16 %v170
    %v448 = vunpack.c.h.b16 %v170
    %v449 = vunpack.c.l.b16 %v171
    %v450 = vunpack.c.h.b16 %v171
    %v451 = vunpack.c.l.b16 %v172
    %v452 = vunpack.c.h.b16 %v172
    %v453 = vunpack.c.l.b16 %v173
    %v454 = vunpack.c.h.b16 %v173
    %v455 = vunpack.c.l.b16 %v174
    %v456 = vunpack.c.h.b16 %v174
    %v457 = vunpack.c.l.b16 %v175
    %v458 = vunpack.c.h.b16 %v175
    %v459 = vunpack.c.l.b16 %v176
    %v460 = vunpack.c.h.b16 %v176
    %v461 = vunpack.c.l.b16 %v177
    %v462 = vunpack.c.h.b16 %v177
    %v463 = vunpack.c.l.b16 %v178
    %v464 = vunpack.c.h.b16 %v178
    %v465 = vunpack.c.l.b16 %v179
    %v466 = vunpack.c.h.b16 %v179
    %v467 = vunpack.c.l.b16 %v180
    %v468 = vunpack.c.h.b16 %v180
    %v469 = vunpack.c.l.b16 %v181
    %v470 = vunpack.c.h.b16 %v181
    %v471 = vunpack.c.l.b16 %v182
    %v472 = vunpack.c.h.b16 %v182
    %v473 = vunpack.c.l.b16 %v183
    %v474 = vunpack.c.h.b16 %v183
    %v475 = vunpack.c.l.b16 %v184
    %v476 = vunpack.c.h.b16 %v184
    %v477 = vunpack.c.l.b16 %v185
    %v478 = vunpack.c.h.b16 %v185
    %v479 = vunpack.c.l.b16 %v186
    %v480 = vunpack.c.h.b16 %v186
    %v481 = vunpack.c.l.b16 %v187
    %v482 = vunpack.c.h.b16 %v187
    %v483 = vunpack.c.l.b16 %v188
    %v484 = vunpack.c.h.b16 %v188
    %v485 = vunpack.c.l.b16 %v189
    %v486 = vunpack.c.h.b16 %v189
    %v487 = vunpack.c.l.b16 %v190
    %v488 = vunpack.c.h.b16 %v190
    %v489 = vunpack.c.l.b16 %v191
    %v490 = vunpack.c.h.b16 %v191
    %v491 = vunpack.c.l.b16 %v192
    %v492 = vunpack.c.h.b16 %v192
    %v493 = vunpack.c.l.b16 %v193
    %v494 = vunpack.c.h.b16 %v193
    %v495 = vunpack.c.l.b16 %v194
    %v496 = vunpack.c.h.b16 %v194
    %v497 = vunpack.c.l.b16 %v195
    %v498 = vunpack.c.h.b16 %v195
    %v499 = vunpack.c.l.b16 %v196
    %v500 = vunpack.c.h.b16 %v196
    %v501 = vunpack.c.l.b16 %v197
    %v502 = vunpack.c.h.b16 %v197
    %v503 = vunpack.c.l.b16 %v198
    %v504 = vunpack.c.h.b16 %v198
    %v505 = vunpack.c.l.b16 %v199
    %v506 = vunpack.c.h.b16 %v199
    %v507 = vunpack.c.l.b16 %v200
    %v508 = vunpack.c.h.b16 %v200
    %v509 = vunpack.c.l.b16 %v201
    %v510 = vunpack.c.h.b16 %v201
    %v511 = vunpack.c.l.b16 %v202
    %v512 = vunpack.c.h.b16 %v202
    %v513 = vunpack.c.l.b16 %v203
    %v514 = vunpack.c.h.b16 %v203
    %v515 = vunpack.c.l.b16 %v204
    %v516 = vunpack.c.h.b16 %v204
    %v517 = vunpack.c.l.b16 %v205
    %v518 = vunpack.c.h.b16 %v205
    %v519 = vunpack.c.l.b16 %v206
    %v520 = vunpack.c.h.b16 %v206
    %v521 = vunpack.c.l.b16 %v207
    %v522 = vunpack.c.h.b16 %v207
    %v523 = vunpack.c.l.b16 %v208
    %v524 = vunpack.c.h.b16 %v208
    %v525 = vunpack.c.l.b16 %v209
    %v526 = vunpack.c.h.b16 %v209
    %v527 = vunpack.c.l.b16 %v210
    %v528 = vunpack.c.h.b16 %v210
    %v529 = vunpack.c.l.b16 %v211
    %v530 = vunpack.c.h.b16 %v211
    %v531 = vunpack.c.l.b16 %v212
    %v532 = vunpack.c.h.b16 %v212
    %v533 = vunpack.c.l.b16 %v213
    %v534 = vunpack.c.h.b16 %v213
    %v535 = vunpack.c.l.b16 %v214
    %v536 = vunpack.c.h.b16 %v214
    %v537 = vunpack.c.l.b16 %v215
    %v538 = vunpack.c.h.b16 %v215
    %v539 = vunpack.c.l.b16 %v216
    %v540 = vunpack.c.h.b16 %v216
    %v541 = vunpack.c.l.b16 %v217
    %v542 = vunpack.c.h.b16 %v217
    %v543 = vunpack.c.l.b16 %v218
    %v544 = vunpack.c.h.b16 %v218
    %v545 = vunpack.c.l.b16 %v219
    %v546 = vunpack.c.h.b16 %v219
    %v547 = vunpack.c.l.b16 %v220
    %v548 = vunpack.c.h.b16 %v220
    %v549 = vunpack.c.l.b16 %v221
    %v550 = vunpack.c.h.b16 %v221
    %v551 = vunpack.c.l.b16 %v222
    %v552 = vunpack.c.h.b16 %v222
    %v553 = vunpack.c.l.b16 %v223
    %v554 = vunpack.c.h.b16 %v223
    %v555 = vunpack.c.l.b16 %v224
    %v556 = vunpack.c.h.b16 %v224
    %v557 = vunpack.c.l.b16 %v225
    %v558 = vunpack.c.h.b16 %v225
    %v559 = vunpack.c.l.b16 %v226
    %v560 = vunpack.c.h.b16 %v226
    %v561 = vunpack.c.l.b16 %v227
    %v562 = vunpack.c.h.b16 %v227
    %v563 = vunpack.c.l.b16 %v228
    %v564 = vunpack.c.h.b16 %v228
    %v565 = vunpack.c.l.b16 %v229
    %v566 = vunpack.c.h.b16 %v229
    %v567 = vunpack.c.l.b16 %v230
    %v568 = vunpack.c.h.b16 %v230
    %v569 = vunpack.c.l.b16 %v231
    %v570 = vunpack.c.h.b16 %v231
    %v571 = vunpack.c.l.b16 %v232
    %v572 = vunpack.c.h.b16 %v232
    %v573 = vunpack.c.l.b16 %v233
    %v574 = vunpack.c.h.b16 %v233
    %v575 = vunpack.c.l.b16 %v234
    %v576 = vunpack.c.h.b16 %v234
    %v577 = vunpack.c.l.b16 %v235
    %v578 = vunpack.c.h.b16 %v235
    %v579 = vunpack.c.l.b16 %v236
    %v580 = vunpack.c.h.b16 %v236
    %v581 = vunpack.c.l.b16 %v237
    %v582 = vunpack.c.h.b16 %v237
    %v583 = vunpack.c.l.b16 %v238
    %v584 = vunpack.c.h.b16 %v238
    %v585 = vunpack.c.l.b16 %v239
    %v586 = vunpack.c.h.b16 %v239
    %v587 = vunpack.c.l.b16 %v240
    %v588 = vunpack.c.h.b16 %v240
    %v589 = vunpack.c.l.b16 %v241
    %v590 = vunpack.c.h.b16 %v241
    %v591 = vunpack.c.l.b16 %v242
    %v592 = vunpack.c.h.b16 %v242
    %v593 = vunpack.c.l.b16 %v243
    %v594 = vunpack.c.h.b16 %v243
    %v595 = vunpack.c.l.b16 %v244
    %v596 = vunpack.c.h.b16 %v244
    %v597 = vunpack.c.l.b16 %v245
    %v598 = vunpack.c.h.b16 %v245
    %v599 = vunpack.c.l.b16 %v246
    %v600 = vunpack.c.h.b16 %v246
    %v601 = vunpack.c.l.b16 %v247
    %v602 = vunpack.c.h.b16 %v247
    %v603 = vunpack.c.l.b16 %v248
    %v604 = vunpack.c.h.b16 %v248
    %v605 = vunpack.c.l.b16 %v249
    %v606 = vunpack.c.h.b16 %v249
    %v607 = vunpack.c.l.b16 %v250
    %v608 = vunpack.c.h.b16 %v250
    %v609 = vunpack.c.l.b16 %v251
    %v610 = vunpack.c.h.b16 %v251
    %v611 = vunpack.c.l.b16 %v252
    %v612 = vunpack.c.h.b16 %v252
    %v613 = vunpack.c.l.b16 %v253
    %v614 = vunpack.c.h.b16 %v253
    %v615 = vunpack.c.l.b16 %v254
    %v616 = vunpack.c.h.b16 %v254
    %v617 = vunpack.c.l.b16 %v255
    %v618 = vunpack.c.h.b16 %v255
    %v619 = vunpack.c.l.b16 %v256
    %v620 = vunpack.c.h.b16 %v256
    %v621 = vunpack.c.l.b16 %v257
    %v622 = vunpack.c.h.b16 %v257
    %v623 = vunpack.c.l.b16 %v258
    %v624 = vunpack.c.h.b16 %v258
    %v625 = vunpack.c.l.b16 %v259
    %v626 = vunpack.c.h.b16 %v259
    %v627 = vunpack.c.l.b16 %v260
    %v628 = vunpack.c.h.b16 %v260
    %v629 = vunpack.c.l.b16 %v261
    %v630 = vunpack.c.h.b16 %v261
    %v631 = vunpack.c.l.b16 %v262
    %v632 = vunpack.c.h.b16 %v262
    %v633 = vunpack.c.l.b16 %v263
    %v634 = vunpack.c.h.b16 %v263
    %v635 = vunpack.c.l.b16 %v264
    %v636 = vunpack.c.h.b16 %v264
    %v637 = vunpack.c.l.b16 %v265
    %v638 = vunpack.c.h.b16 %v265
    %v639 = vunpack.c.l.b16 %v266
    %v640 = vunpack.c.h.b16 %v266
    %v641 = vunpack.c.l.b16 %v267
    %v642 = vunpack.c.h.b16 %v267
    %v643 = vunpack.c.l.b16 %v268
    %v644 = vunpack.c.h.b16 %v268
    %v645 = vunpack.c.l.b16 %v269
    %v646 = vunpack.c.h.b16 %v269
    %v647 = vunpack.c.l.b16 %v270
    %v648 = vunpack.c.h.b16 %v270
    %v649 = vunpack.c.l.b16 %v271
    %v650 = vunpack.c.h.b16 %v271
    %v651 = vunpack.c.l.b16 %v272
    %v652 = vunpack.c.h.b16 %v272
    %v653 = vunpack.c.l.b16 %v273
    %v654 = vunpack.c.h.b16 %v273
    %v655 = vunpack.c.l.b16 %v274
    %v656 = vunpack.c.h.b16 %v274
    %v657 = vunpack.c.l.b16 %v275
    %v658 = vunpack.c.h.b16 %v275
    %v659 = vunpack.c.l.b16 %v276
    %v660 = vunpack.c.h.b16 %v276
    %v661 = vunpack.c.l.b16 %v277
    %v662 = vunpack.c.h.b16 %v277
    %v663 = vunpack.c.l.b16 %v278
    %v664 = vunpack.c.h.b16 %v278
    %v665 = vunpack.c.l.b16 %v279
    %v666 = vunpack.c.h.b16 %v279
    %v667 = vunpack.c.l.b16 %v280
    %v668 = vunpack.c.h.b16 %v280
    %v669 = vunpack.c.l.b16 %v281
    %v670 = vunpack.c.h.b16 %v281
    %v671 = vunpack.c.l.b16 %v282
    %v672 = vunpack.c.h.b16 %v282
    %v673 = vpack.c.b16 %v419, %v417
    %v674 = vpack.c.b16 %v420, %v418
    %v675 = vpack.c.b16 %v423, %v421
    %v676 = vpack.c.b16 %v424, %v422
    %v677 = vpack.c.b16 %v427, %v425
    %v678 = vpack.c.b16 %v428, %v426
    %v679 = vpack.c.b16 %v431, %v429
    %v680 = vpack.c.b16 %v432, %v430
    %v681 = vpack.c.b16 %v435, %v433
    %v682 = vpack.c.b16 %v436, %v434
    %v683 = vpack.c.b16 %v439, %v437
    %v684 = vpack.c.b16 %v440, %v438
    %v685 = vpack.c.b16 %v443, %v441
    %v686 = vpack.c.b16 %v444, %v442
    %v687 = vpack.c.b16 %v447, %v445
    %v688 = vpack.c.b16 %v448, %v446
    %v689 = vpack.c.b16 %v451, %v449
    %v690 = vpack.c.b16 %v452, %v450
    %v691 = vpack.c.b16 %v455, %v453
    %v692 = vpack.c.b16 %v456, %v454
    %v693 = vpack.c.b16 %v459, %v457
    %v694 = vpack.c.b16 %v460, %v458
    %v695 = vpack.c.b16 %v463, %v461
    %v696 = vpack.c.b16 %v464, %v462
    %v697 = vpack.c.b16 %v467, %v465
    %v698 = vpack.c.b16 %v468, %v466
    %v699 = vpack.c.b16 %v471, %v469
    %v700 = vpack.c.b16 %v472, %v470
    %v701 = vpack.c.b16 %v475, %v473
    %v702 = vpack.c.b16 %v476, %v474
    %v703 = vpack.c.b16 %v479, %v477
    %v704 = vpack.c.b16 %v480, %v478
    %v705 = vpack.c.b16 %v483, %v481
    %v706 = vpack.c.b16 %v484, %v482
    %v707 = vpack.c.b16 %v487, %v485
    %v708 = vpack.c.b16 %v488, %v486
    %v709 = vpack.c.b16 %v491, %v489
    %v710 = vpack.c.b16 %v492, %v490
    %v711 = vpack.c.b16 %v495, %v493
    %v712 = vpack.c.b16 %v496, %v494
    %v713 = vpack.c.b16 %v499, %v497
    %v714 = vpack.c.b16 %v500, %v498
    %v715 = vpack.c.b16 %v503, %v501
    %v716 = vpack.c.b16 %v504, %v502
    %v717 = vpack.c.b16 %v507, %v505
    %v718 = vpack.c.b16 %v508, %v506
    %v719 = vpack.c.b16 %v511, %v509
    %v720 = vpack.c.b16 %v512, %v510
    %v721 = vpack.c.b16 %v515, %v513
    %v722 = vpack.c.b16 %v516, %v514
    %v723 = vpack.c.b16 %v519, %v517
    %v724 = vpack.c.b16 %v520, %v518
    %v725 = vpack.c.b16 %v523, %v521
    %v726 = vpack.c.b16 %v524, %v522
    %v727 = vpack.c.b16 %v527, %v525
    %v728 = vpack.c.b16 %v528, %v526
    %v729 = vpack.c.b16 %v531, %v529
    %v730 = vpack.c.b16 %v532, %v530
    %v731 = vpack.c.b16 %v535, %v533
    %v732 = vpack.c.b16 %v536, %v534
    %v733 = vpack.c.b16 %v539, %v537
    %v734 = vpack.c.b16 %v540, %v538
    %v735 = vpack.c.b16 %v543, %v541
    %v736 = vpack.c.b16 %v544, %v542
    %v737 = vpack.c.b16 %v547, %v545
    %v738 = vpack.c.b16 %v548, %v546
    %v739 = vpack.c.b16 %v551, %v549
    %v740 = vpack.c.b16 %v552, %v550
    %v741 = vpack.c.b16 %v555, %v553
    %v742 = vpack.c.b16 %v556, %v554
    %v743 = vpack.c.b16 %v559, %v557
    %v744 = vpack.c.b16 %v560, %v558
    %v745 = vpack.c.b16 %v563, %v561
    %v746 = vpack.c.b16 %v564, %v562
    %v747 = vpack.c.b16 %v567, %v565
    %v748 = vpack.c.b16 %v568, %v566
    %v749 = vpack.c.b16 %v571, %v569
    %v750 = vpack.c.b16 %v572, %v570
    %v751 = vpack.c.b16 %v575, %v573
    %v752 = vpack.c.b16 %v576, %v574
    %v753 = vpack.c.b16 %v579, %v577
    %v754 = vpack.c.b16 %v580, %v578
    %v755 = vpack.c.b16 %v583, %v581
    %v756 = vpack.c.b16 %v584, %v582
    %v757 = vpack.c.b16 %v587, %v585
    %v758 = vpack.c.b16 %v588, %v586
    %v759 = vpack.c.b16 %v591, %v589
    %v760 = vpack.c.b16 %v592, %v590
    %v761 = vpack.c.b16 %v595, %v593
    %v762 = vpack.c.b16 %v596, %v594
    %v763 = vpack.c.b16 %v599, %v597
    %v764 = vpack.c.b16 %v600, %v598
    %v765 = vpack.c.b16 %v603, %v601
    %v766 = vpack.c.b16 %v604, %v602
    %v767 = vpack.c.b16 %v607, %v605
    %v768 = vpack.c.b16 %v608, %v606
    %v769 = vpack.c.b16 %v611, %v609
    %v770 = vpack.c.b16 %v612, %v610
    %v771 = vpack.c.b16 %v615, %v613
    %v772 = vpack.c.b16 %v616, %v614
    %v773 = vpack.c.b16 %v619, %v617
    %v774 = vpack.c.b16 %v620, %v618
    %v775 = vpack.c.b16 %v623, %v621
    %v776 = vpack.c.b16 %v624, %v622
    %v777 = vpack.c.b16 %v627, %v625
    %v778 = vpack.c.b16 %v628, %v626
    %v779 = vpack.c.b16 %v631, %v629
    %v780 = vpack.c.b16 %v632, %v630
    %v781 = vpack.c.b16 %v635, %v633
    %v782 = vpack.c.b16 %v636, %v634
    %v783 = vpack.c.b16 %v639, %v637
    %v784 = vpack.c.b16 %v640, %v638
    %v785 = vpack.c.b16 %v643, %v641
    %v786 = vpack.c.b16 %v644, %v642
    %v787 = vpack.c.b16 %v647, %v645
    %v788 = vpack.c.b16 %v648, %v646
    %v789 = vpack.c.b16 %v651, %v649
    %v790 = vpack.c.b16 %v652, %v650
    %v791 = vpack.c.b16 %v655, %v653
    %v792 = vpack.c.b16 %v656, %v654
    %v793 = vpack.c.b16 %v659, %v657
    %v794 = vpack.c.b16 %v660, %v658
    %v795 = vpack.c.b16 %v663, %v661
    %v796 = vpack.c.b16 %v664, %v662
    %v797 = vpack.c.b16 %v667, %v665
    %v798 = vpack.c.b16 %v668, %v666
    %v799 = vpack.c.b16 %v671, %v669
    %v800 = vpack.c.b16 %v672, %v670
    %929 = vmatpush.bf16.msra.mxu0 %v687
    %930 = vmatpush.bf16.msra.mxu0 %v685
    %931 = vmatpush.bf16.msra.mxu0 %v683
    %932 = vmatpush.bf16.msra.mxu0 %v681
    %933 = vmatpush.bf16.msra.mxu0 %v679
    %934 = vmatpush.bf16.msra.mxu0 %v677
    %935 = vmatpush.bf16.msra.mxu0 %v675
    %936 = vmatpush.bf16.msra.mxu0 %v673
    %937 = vmatmul.bf16.gmra.mxu0 %v147
    %v938 = vpop.f32.mrf.mxu0
    %v939 = vadd.f32 %v285, %v938
    %v940 = vpop.f32.mrf.mxu0
    %941 = vdwg.mxu0
    %942 = vmatpush.bf16.msra.mxu0 %v703
    %943 = vmatpush.bf16.msra.mxu0 %v701
    %944 = vmatpush.bf16.msra.mxu0 %v699
    %945 = vmatpush.bf16.msra.mxu0 %v697
    %946 = vmatpush.bf16.msra.mxu0 %v695
    %947 = vmatpush.bf16.msra.mxu0 %v693
    %948 = vmatpush.bf16.msra.mxu0 %v691
    %949 = vmatpush.bf16.msra.mxu0 %v689
    %950 = vmatmul.bf16.gmra.mxu0 %v148
    %v951 = vpop.f32.mrf.mxu0
    %v952 = vadd.f32 %v939, %v951
    %v953 = vpop.f32.mrf.mxu0
    %954 = vdwg.mxu0
    %955 = vmatpush.bf16.msra.mxu0 %v719
    %956 = vmatpush.bf16.msra.mxu0 %v717
    %957 = vmatpush.bf16.msra.mxu0 %v715
    %958 = vmatpush.bf16.msra.mxu0 %v713
    %959 = vmatpush.bf16.msra.mxu0 %v711
    %960 = vmatpush.bf16.msra.mxu0 %v709
    %961 = vmatpush.bf16.msra.mxu0 %v707
    %962 = vmatpush.bf16.msra.mxu0 %v705
    %963 = vmatmul.bf16.gmra.mxu0 %v149
    %v964 = vpop.f32.mrf.mxu0
    %v965 = vadd.f32 %v952, %v964
    %v966 = vpop.f32.mrf.mxu0
    %967 = vdwg.mxu0
    %968 = vmatpush.bf16.msra.mxu0 %v735
    %969 = vmatpush.bf16.msra.mxu0 %v733
    %970 = vmatpush.bf16.msra.mxu0 %v731
    %971 = vmatpush.bf16.msra.mxu0 %v729
    %972 = vmatpush.bf16.msra.mxu0 %v727
    %973 = vmatpush.bf16.msra.mxu0 %v725
    %974 = vmatpush.bf16.msra.mxu0 %v723
    %975 = vmatpush.bf16.msra.mxu0 %v721
    %976 = vmatmul.bf16.gmra.mxu0 %v150
    %v977 = vpop.f32.mrf.mxu0
    %v978 = vadd.f32 %v965, %v977
    %v979 = vpop.f32.mrf.mxu0
    %980 = vdwg.mxu0
    %981 = vmatpush.bf16.msra.mxu0 %v751
    %982 = vmatpush.bf16.msra.mxu0 %v749
    %983 = vmatpush.bf16.msra.mxu0 %v747
    %984 = vmatpush.bf16.msra.mxu0 %v745
    %985 = vmatpush.bf16.msra.mxu0 %v743
    %986 = vmatpush.bf16.msra.mxu0 %v741
    %987 = vmatpush.bf16.msra.mxu0 %v739
    %988 = vmatpush.bf16.msra.mxu0 %v737
    %989 = vmatmul.bf16.gmra.mxu0 %v151
    %v990 = vpop.f32.mrf.mxu0
    %v991 = vadd.f32 %v978, %v990
    %v992 = vpop.f32.mrf.mxu0
    %993 = vdwg.mxu0
    %994 = vmatpush.bf16.msra.mxu0 %v767
    %995 = vmatpush.bf16.msra.mxu0 %v765
    %996 = vmatpush.bf16.msra.mxu0 %v763
    %997 = vmatpush.bf16.msra.mxu0 %v761
    %998 = vmatpush.bf16.msra.mxu0 %v759
    %999 = vmatpush.bf16.msra.mxu0 %v757
    %1000 = vmatpush.bf16.msra.mxu0 %v755
    %1001 = vmatpush.bf16.msra.mxu0 %v753
    %1002 = vmatmul.bf16.gmra.mxu0 %v152
    %v1003 = vpop.f32.mrf.mxu0
    %v1004 = vadd.f32 %v991, %v1003
    %v1005 = vpop.f32.mrf.mxu0
    %1006 = vdwg.mxu0
    %1007 = vmatpush.bf16.msra.mxu0 %v783
    %1008 = vmatpush.bf16.msra.mxu0 %v781
    %1009 = vmatpush.bf16.msra.mxu0 %v779
    %1010 = vmatpush.bf16.msra.mxu0 %v777
    %1011 = vmatpush.bf16.msra.mxu0 %v775
    %1012 = vmatpush.bf16.msra.mxu0 %v773
    %1013 = vmatpush.bf16.msra.mxu0 %v771
    %1014 = vmatpush.bf16.msra.mxu0 %v769
    %1015 = vmatmul.bf16.gmra.mxu0 %v153
    %v1016 = vpop.f32.mrf.mxu0
    %v1017 = vadd.f32 %v1004, %v1016
    %v1018 = vpop.f32.mrf.mxu0
    %1019 = vdwg.mxu0
    %1020 = vmatpush.bf16.msra.mxu0 %v799
    %1021 = vmatpush.bf16.msra.mxu0 %v797
    %1022 = vmatpush.bf16.msra.mxu0 %v795
    %1023 = vmatpush.bf16.msra.mxu0 %v793
    %1024 = vmatpush.bf16.msra.mxu0 %v791
    %1025 = vmatpush.bf16.msra.mxu0 %v789
    %1026 = vmatpush.bf16.msra.mxu0 %v787
    %1027 = vmatpush.bf16.msra.mxu0 %v785
    %1028 = vmatmul.bf16.gmra.mxu0 %v154
    %v1029 = vpop.f32.mrf.mxu0
    %v1030 = vadd.f32 %v1017, %v1029
    %v1031 = vpop.f32.mrf.mxu0
    %1032 = vdwg.mxu0
    %1033 = vmatpush.bf16.msra.mxu0 %v688
    %1034 = vmatpush.bf16.msra.mxu0 %v686
    %1035 = vmatpush.bf16.msra.mxu0 %v684
    %1036 = vmatpush.bf16.msra.mxu0 %v682
    %1037 = vmatpush.bf16.msra.mxu0 %v680
    %1038 = vmatpush.bf16.msra.mxu0 %v678
    %1039 = vmatpush.bf16.msra.mxu0 %v676
    %1040 = vmatpush.bf16.msra.mxu0 %v674
    %1041 = vmatmul.bf16.gmra.mxu0 %v147
    %v1042 = vpop.f32.mrf.mxu0
    %v1043 = vadd.f32 %v286, %v1042
    %v1044 = vpop.f32.mrf.mxu0
    %1045 = vdwg.mxu0
    %1046 = vmatpush.bf16.msra.mxu0 %v704
    %1047 = vmatpush.bf16.msra.mxu0 %v702
    %1048 = vmatpush.bf16.msra.mxu0 %v700
    %1049 = vmatpush.bf16.msra.mxu0 %v698
    %1050 = vmatpush.bf16.msra.mxu0 %v696
    %1051 = vmatpush.bf16.msra.mxu0 %v694
    %1052 = vmatpush.bf16.msra.mxu0 %v692
    %1053 = vmatpush.bf16.msra.mxu0 %v690
    %1054 = vmatmul.bf16.gmra.mxu0 %v148
    %v1055 = vpop.f32.mrf.mxu0
    %v1056 = vadd.f32 %v1043, %v1055
    %v1057 = vpop.f32.mrf.mxu0
    %1058 = vdwg.mxu0
    %1059 = vmatpush.bf16.msra.mxu0 %v720
    %1060 = vmatpush.bf16.msra.mxu0 %v718
    %1061 = vmatpush.bf16.msra.mxu0 %v716
    %1062 = vmatpush.bf16.msra.mxu0 %v714
    %1063 = vmatpush.bf16.msra.mxu0 %v712
    %1064 = vmatpush.bf16.msra.mxu0 %v710
    %1065 = vmatpush.bf16.msra.mxu0 %v708
    %1066 = vmatpush.bf16.msra.mxu0 %v706
    %1067 = vmatmul.bf16.gmra.mxu0 %v149
    %v1068 = vpop.f32.mrf.mxu0
    %v1069 = vadd.f32 %v1056, %v1068
    %v1070 = vpop.f32.mrf.mxu0
    %1071 = vdwg.mxu0
    %1072 = vmatpush.bf16.msra.mxu0 %v736
    %1073 = vmatpush.bf16.msra.mxu0 %v734
    %1074 = vmatpush.bf16.msra.mxu0 %v732
    %1075 = vmatpush.bf16.msra.mxu0 %v730
    %1076 = vmatpush.bf16.msra.mxu0 %v728
    %1077 = vmatpush.bf16.msra.mxu0 %v726
    %1078 = vmatpush.bf16.msra.mxu0 %v724
    %1079 = vmatpush.bf16.msra.mxu0 %v722
    %1080 = vmatmul.bf16.gmra.mxu0 %v150
    %v1081 = vpop.f32.mrf.mxu0
    %v1082 = vadd.f32 %v1069, %v1081
    %v1083 = vpop.f32.mrf.mxu0
    %1084 = vdwg.mxu0
    %1085 = vmatpush.bf16.msra.mxu0 %v752
    %1086 = vmatpush.bf16.msra.mxu0 %v750
    %1087 = vmatpush.bf16.msra.mxu0 %v748
    %1088 = vmatpush.bf16.msra.mxu0 %v746
    %1089 = vmatpush.bf16.msra.mxu0 %v744
    %1090 = vmatpush.bf16.msra.mxu0 %v742
    %1091 = vmatpush.bf16.msra.mxu0 %v740
    %1092 = vmatpush.bf16.msra.mxu0 %v738
    %1093 = vmatmul.bf16.gmra.mxu0 %v151
    %v1094 = vpop.f32.mrf.mxu0
    %v1095 = vadd.f32 %v1082, %v1094
    %v1096 = vpop.f32.mrf.mxu0
    %1097 = vdwg.mxu0
    %1098 = vmatpush.bf16.msra.mxu0 %v768
    %1099 = vmatpush.bf16.msra.mxu0 %v766
    %1100 = vmatpush.bf16.msra.mxu0 %v764
    %1101 = vmatpush.bf16.msra.mxu0 %v762
    %1102 = vmatpush.bf16.msra.mxu0 %v760
    %1103 = vmatpush.bf16.msra.mxu0 %v758
    %1104 = vmatpush.bf16.msra.mxu0 %v756
    %1105 = vmatpush.bf16.msra.mxu0 %v754
    %1106 = vmatmul.bf16.gmra.mxu0 %v152
    %v1107 = vpop.f32.mrf.mxu0
    %v1108 = vadd.f32 %v1095, %v1107
    %v1109 = vpop.f32.mrf.mxu0
    %1110 = vdwg.mxu0
    %1111 = vmatpush.bf16.msra.mxu0 %v784
    %1112 = vmatpush.bf16.msra.mxu0 %v782
    %1113 = vmatpush.bf16.msra.mxu0 %v780
    %1114 = vmatpush.bf16.msra.mxu0 %v778
    %1115 = vmatpush.bf16.msra.mxu0 %v776
    %1116 = vmatpush.bf16.msra.mxu0 %v774
    %1117 = vmatpush.bf16.msra.mxu0 %v772
    %1118 = vmatpush.bf16.msra.mxu0 %v770
    %1119 = vmatmul.bf16.gmra.mxu0 %v153
    %v1120 = vpop.f32.mrf.mxu0
    %v1121 = vadd.f32 %v1108, %v1120
    %v1122 = vpop.f32.mrf.mxu0
    %1123 = vdwg.mxu0
    %1124 = vmatpush.bf16.msra.mxu0 %v800
    %1125 = vmatpush.bf16.msra.mxu0 %v798
    %1126 = vmatpush.bf16.msra.mxu0 %v796
    %1127 = vmatpush.bf16.msra.mxu0 %v794
    %1128 = vmatpush.bf16.msra.mxu0 %v792
    %1129 = vmatpush.bf16.msra.mxu0 %v790
    %1130 = vmatpush.bf16.msra.mxu0 %v788
    %1131 = vmatpush.bf16.msra.mxu0 %v786
    %1132 = vmatmul.bf16.gmra.mxu0 %v154
    %v1133 = vpop.f32.mrf.mxu0
    %v1134 = vadd.f32 %v1121, %v1133
    %v1135 = vpop.f32.mrf.mxu0
    %1136 = vdwg.mxu0
    %v1139 = vrot.slane %v1134, 7
    %vm1140 = vcmask 1040384
    %v1141 = vsel %vm1140, %v1030, %v1139
    %vm1142 = vcmask 1041409
    %v1143 = vsel %vm1142, %v1030, %v1139
    %v1144 = vrot.slane %v1143, 1
    %v1145 = vld [vmem:[#allocation7] sm:$0xff]
    %v1146 = vld [vmem:[#allocation7 + $0x8] sm:$0xff]
    %v1147 = vld [vmem:[#allocation7 + $0x10] sm:$0xff]
    %v1148 = vld [vmem:[#allocation7 + $0x18] sm:$0xff]
    %v1149 = vperm.slane %v1141, 0
    %v1150 = vperm.slane %v1141, 1
    %v1151 = vperm.slane %v1144, 0
    %v1152 = vperm.slane %v1144, 1
    %v1157 = vadd.f32 %v1149, %v1145
    %v1158 = vadd.f32 %v1150, %v1146
    %v1159 = vadd.f32 %v1149, %v1147
    %v1160 = vadd.f32 %v1150, %v1148
    %v1161 = vadd.f32 %v1151, %v1145
    %v1162 = vadd.f32 %v1152, %v1146
    %v1163 = vadd.f32 %v1151, %v1147
    %v1164 = vadd.f32 %v1152, %v1148
    %v1165 = vxor.u32 %v1157, 2147483648
    %v1166 = vxor.u32 %v1158, 2147483648
    %v1167 = vxor.u32 %v1159, 2147483648
    %v1168 = vxor.u32 %v1160, 2147483648
    %v1169 = vxor.u32 %v1161, 2147483648
    %v1170 = vxor.u32 %v1162, 2147483648
    %v1171 = vxor.u32 %v1163, 2147483648
    %v1172 = vxor.u32 %v1164, 2147483648
    %v1173 = vmul.f32 %v1165, 1.442695
    %v1174 = vpow.pop %v1173
    %v1175 = vmul.f32 %v1166, 1.442695
    %v1176 = vpow.pop %v1175
    %v1177 = vmul.f32 %v1167, 1.442695
    %v1178 = vpow.pop %v1177
    %v1179 = vmul.f32 %v1168, 1.442695
    %v1180 = vpow.pop %v1179
    %v1181 = vmul.f32 %v1169, 1.442695
    %v1182 = vpow.pop %v1181
    %v1183 = vmul.f32 %v1170, 1.442695
    %v1184 = vpow.pop %v1183
    %v1185 = vmul.f32 %v1171, 1.442695
    %v1186 = vpow.pop %v1185
    %v1187 = vmul.f32 %v1172, 1.442695
    %v1188 = vpow.pop %v1187
    %v1189 = vadd.f32 %v1174, 1.0
    %v1190 = vadd.f32 %v1176, 1.0
    %v1191 = vadd.f32 %v1178, 1.0
    %v1192 = vadd.f32 %v1180, 1.0
    %v1193 = vadd.f32 %v1182, 1.0
    %v1194 = vadd.f32 %v1184, 1.0
    %v1195 = vadd.f32 %v1186, 1.0
    %v1196 = vadd.f32 %v1188, 1.0
    %v1197 = vrcp.pop %v1189
    %v1198 = vmul.f32 %v1189, %v1197
    %v1199 = vsub.f32 1.0, %v1198
    %v1200 = vmul.f32 %v1197, %v1199
    %v1201 = vadd.f32 %v1197, %v1200
    %vm1202 = vweird.f32 %v1189
    %vm1203 = vweird.f32 %v1197
    %vm1204 = vmor %vm1202, %vm1203
    %v1205 = vsel %vm1204, %v1197, %v1201
    %v1206 = vand.u32 2147483647, %v1189
    %vm1207 = vcmp.eq.f32.partialorder %v1206, 8.507059e+37
    %v1208 = vand.u32 %v1189, 2147483648
    %v1209 = vor.u32 1.1754944e-38, %v1208
    %v1210 = vsel %vm1207, %v1209, %v1205
    %v1211 = vmul.f32 1.0, %v1210
    %v1212 = vrcp.pop %v1190
    %v1213 = vmul.f32 %v1190, %v1212
    %v1214 = vsub.f32 1.0, %v1213
    %v1215 = vmul.f32 %v1212, %v1214
    %v1216 = vadd.f32 %v1212, %v1215
    %vm1217 = vweird.f32 %v1190
    %vm1218 = vweird.f32 %v1212
    %vm1219 = vmor %vm1217, %vm1218
    %v1220 = vsel %vm1219, %v1212, %v1216
    %v1221 = vand.u32 2147483647, %v1190
    %vm1222 = vcmp.eq.f32.partialorder %v1221, 8.507059e+37
    %v1223 = vand.u32 %v1190, 2147483648
    %v1224 = vor.u32 1.1754944e-38, %v1223
    %v1225 = vsel %vm1222, %v1224, %v1220
    %v1226 = vmul.f32 1.0, %v1225
    %v1227 = vrcp.pop %v1191
    %v1228 = vmul.f32 %v1191, %v1227
    %v1229 = vsub.f32 1.0, %v1228
    %v1230 = vmul.f32 %v1227, %v1229
    %v1231 = vadd.f32 %v1227, %v1230
    %vm1232 = vweird.f32 %v1191
    %vm1233 = vweird.f32 %v1227
    %vm1234 = vmor %vm1232, %vm1233
    %v1235 = vsel %vm1234, %v1227, %v1231
    %v1236 = vand.u32 2147483647, %v1191
    %vm1237 = vcmp.eq.f32.partialorder %v1236, 8.507059e+37
    %v1238 = vand.u32 %v1191, 2147483648
    %v1239 = vor.u32 1.1754944e-38, %v1238
    %v1240 = vsel %vm1237, %v1239, %v1235
    %v1241 = vmul.f32 1.0, %v1240
    %v1242 = vrcp.pop %v1192
    %v1243 = vmul.f32 %v1192, %v1242
    %v1244 = vsub.f32 1.0, %v1243
    %v1245 = vmul.f32 %v1242, %v1244
    %v1246 = vadd.f32 %v1242, %v1245
    %vm1247 = vweird.f32 %v1192
    %vm1248 = vweird.f32 %v1242
    %vm1249 = vmor %vm1247, %vm1248
    %v1250 = vsel %vm1249, %v1242, %v1246
    %v1251 = vand.u32 2147483647, %v1192
    %vm1252 = vcmp.eq.f32.partialorder %v1251, 8.507059e+37
    %v1253 = vand.u32 %v1192, 2147483648
    %v1254 = vor.u32 1.1754944e-38, %v1253
    %v1255 = vsel %vm1252, %v1254, %v1250
    %v1256 = vmul.f32 1.0, %v1255
    %v1257 = vrcp.pop %v1193
    %v1258 = vmul.f32 %v1193, %v1257
    %v1259 = vsub.f32 1.0, %v1258
    %v1260 = vmul.f32 %v1257, %v1259
    %v1261 = vadd.f32 %v1257, %v1260
    %vm1262 = vweird.f32 %v1193
    %vm1263 = vweird.f32 %v1257
    %vm1264 = vmor %vm1262, %vm1263
    %v1265 = vsel %vm1264, %v1257, %v1261
    %v1266 = vand.u32 2147483647, %v1193
    %vm1267 = vcmp.eq.f32.partialorder %v1266, 8.507059e+37
    %v1268 = vand.u32 %v1193, 2147483648
    %v1269 = vor.u32 1.1754944e-38, %v1268
    %v1270 = vsel %vm1267, %v1269, %v1265
    %v1271 = vmul.f32 1.0, %v1270
    %v1272 = vrcp.pop %v1194
    %v1273 = vmul.f32 %v1194, %v1272
    %v1274 = vsub.f32 1.0, %v1273
    %v1275 = vmul.f32 %v1272, %v1274
    %v1276 = vadd.f32 %v1272, %v1275
    %vm1277 = vweird.f32 %v1194
    %vm1278 = vweird.f32 %v1272
    %vm1279 = vmor %vm1277, %vm1278
    %v1280 = vsel %vm1279, %v1272, %v1276
    %v1281 = vand.u32 2147483647, %v1194
    %vm1282 = vcmp.eq.f32.partialorder %v1281, 8.507059e+37
    %v1283 = vand.u32 %v1194, 2147483648
    %v1284 = vor.u32 1.1754944e-38, %v1283
    %v1285 = vsel %vm1282, %v1284, %v1280
    %v1286 = vmul.f32 1.0, %v1285
    %v1287 = vrcp.pop %v1195
    %v1288 = vmul.f32 %v1195, %v1287
    %v1289 = vsub.f32 1.0, %v1288
    %v1290 = vmul.f32 %v1287, %v1289
    %v1291 = vadd.f32 %v1287, %v1290
    %vm1292 = vweird.f32 %v1195
    %vm1293 = vweird.f32 %v1287
    %vm1294 = vmor %vm1292, %vm1293
    %v1295 = vsel %vm1294, %v1287, %v1291
    %v1296 = vand.u32 2147483647, %v1195
    %vm1297 = vcmp.eq.f32.partialorder %v1296, 8.507059e+37
    %v1298 = vand.u32 %v1195, 2147483648
    %v1299 = vor.u32 1.1754944e-38, %v1298
    %v1300 = vsel %vm1297, %v1299, %v1295
    %v1301 = vmul.f32 1.0, %v1300
    %v1302 = vrcp.pop %v1196
    %v1303 = vmul.f32 %v1196, %v1302
    %v1304 = vsub.f32 1.0, %v1303
    %v1305 = vmul.f32 %v1302, %v1304
    %v1306 = vadd.f32 %v1302, %v1305
    %vm1307 = vweird.f32 %v1196
    %vm1308 = vweird.f32 %v1302
    %vm1309 = vmor %vm1307, %vm1308
    %v1310 = vsel %vm1309, %v1302, %v1306
    %v1311 = vand.u32 2147483647, %v1196
    %vm1312 = vcmp.eq.f32.partialorder %v1311, 8.507059e+37
    %v1313 = vand.u32 %v1196, 2147483648
    %v1314 = vor.u32 1.1754944e-38, %v1313
    %v1315 = vsel %vm1312, %v1314, %v1310
    %v1316 = vmul.f32 1.0, %v1315
    %v1317 = vmul.f32 %v1157, %v1211
    %v1318 = vmul.f32 %v1158, %v1226
    %v1319 = vmul.f32 %v1159, %v1241
    %v1320 = vmul.f32 %v1160, %v1256
    %v1321 = vmul.f32 %v1161, %v1271
    %v1322 = vmul.f32 %v1162, %v1286
    %v1323 = vmul.f32 %v1163, %v1301
    %v1324 = vmul.f32 %v1164, %v1316
    %v1325 = vpack.c.bf16 %v1319, %v1317
    %v1326 = vpack.c.bf16 %v1320, %v1318
    %v1327 = vpack.c.bf16 %v1323, %v1321
    %v1328 = vpack.c.bf16 %v1324, %v1322
    %v1329 = vld [vmem:[#allocation9] sm:$0xff]
    %v1330 = vld [vmem:[#allocation9 + $0x8] sm:$0xff]
    %v1331 = vld [vmem:[#allocation9 + $0x10] sm:$0xff]
    %v1332 = vld [vmem:[#allocation9 + $0x18] sm:$0xff]
    %v1333 = vld [vmem:[#allocation9 + $0x20] sm:$0xff]
    %v1334 = vld [vmem:[#allocation9 + $0x28] sm:$0xff]
    %v1335 = vld [vmem:[#allocation9 + $0x30] sm:$0xff]
    %v1336 = vld [vmem:[#allocation9 + $0x38] sm:$0xff]
    %v1337 = vld [vmem:[#allocation9 + $0x40] sm:$0xff]
    %v1338 = vld [vmem:[#allocation9 + $0x48] sm:$0xff]
    %v1339 = vld [vmem:[#allocation9 + $0x50] sm:$0xff]
    %v1340 = vld [vmem:[#allocation9 + $0x58] sm:$0xff]
    %v1341 = vld [vmem:[#allocation9 + $0x60] sm:$0xff]
    %v1342 = vld [vmem:[#allocation9 + $0x68] sm:$0xff]
    %v1343 = vld [vmem:[#allocation9 + $0x70] sm:$0xff]
    %v1344 = vld [vmem:[#allocation9 + $0x78] sm:$0xff]
    %v1345 = vld [vmem:[#allocation9 + $0x80] sm:$0xff]
    %v1346 = vld [vmem:[#allocation9 + $0x88] sm:$0xff]
    %v1347 = vld [vmem:[#allocation9 + $0x90] sm:$0xff]
    %v1348 = vld [vmem:[#allocation9 + $0x98] sm:$0xff]
    %v1349 = vld [vmem:[#allocation9 + $0xa0] sm:$0xff]
    %v1350 = vld [vmem:[#allocation9 + $0xa8] sm:$0xff]
    %v1351 = vld [vmem:[#allocation9 + $0xb0] sm:$0xff]
    %v1352 = vld [vmem:[#allocation9 + $0xb8] sm:$0xff]
    %v1353 = vld [vmem:[#allocation9 + $0xc0] sm:$0xff]
    %v1354 = vld [vmem:[#allocation9 + $0xc8] sm:$0xff]
    %v1355 = vld [vmem:[#allocation9 + $0xd0] sm:$0xff]
    %v1356 = vld [vmem:[#allocation9 + $0xd8] sm:$0xff]
    %v1357 = vld [vmem:[#allocation9 + $0xe0] sm:$0xff]
    %v1358 = vld [vmem:[#allocation9 + $0xe8] sm:$0xff]
    %v1359 = vld [vmem:[#allocation9 + $0xf0] sm:$0xff]
    %v1360 = vld [vmem:[#allocation9 + $0xf8] sm:$0xff]
    %v1361 = vld [vmem:[#allocation9 + $0x100] sm:$0xff]
    %v1362 = vld [vmem:[#allocation9 + $0x108] sm:$0xff]
    %v1363 = vld [vmem:[#allocation9 + $0x110] sm:$0xff]
    %v1364 = vld [vmem:[#allocation9 + $0x118] sm:$0xff]
    %v1365 = vld [vmem:[#allocation9 + $0x120] sm:$0xff]
    %v1366 = vld [vmem:[#allocation9 + $0x128] sm:$0xff]
    %v1367 = vld [vmem:[#allocation9 + $0x130] sm:$0xff]
    %v1368 = vld [vmem:[#allocation9 + $0x138] sm:$0xff]
    %v1369 = vld [vmem:[#allocation9 + $0x140] sm:$0xff]
    %v1370 = vld [vmem:[#allocation9 + $0x148] sm:$0xff]
    %v1371 = vld [vmem:[#allocation9 + $0x150] sm:$0xff]
    %v1372 = vld [vmem:[#allocation9 + $0x158] sm:$0xff]
    %v1373 = vld [vmem:[#allocation9 + $0x160] sm:$0xff]
    %v1374 = vld [vmem:[#allocation9 + $0x168] sm:$0xff]
    %v1375 = vld [vmem:[#allocation9 + $0x170] sm:$0xff]
    %v1376 = vld [vmem:[#allocation9 + $0x178] sm:$0xff]
    %v1377 = vld [vmem:[#allocation9 + $0x180] sm:$0xff]
    %v1378 = vld [vmem:[#allocation9 + $0x188] sm:$0xff]
    %v1379 = vld [vmem:[#allocation9 + $0x190] sm:$0xff]
    %v1380 = vld [vmem:[#allocation9 + $0x198] sm:$0xff]
    %v1381 = vld [vmem:[#allocation9 + $0x1a0] sm:$0xff]
    %v1382 = vld [vmem:[#allocation9 + $0x1a8] sm:$0xff]
    %v1383 = vld [vmem:[#allocation9 + $0x1b0] sm:$0xff]
    %v1384 = vld [vmem:[#allocation9 + $0x1b8] sm:$0xff]
    %v1385 = vld [vmem:[#allocation9 + $0x1c0] sm:$0xff]
    %v1386 = vld [vmem:[#allocation9 + $0x1c8] sm:$0xff]
    %v1387 = vld [vmem:[#allocation9 + $0x1d0] sm:$0xff]
    %v1388 = vld [vmem:[#allocation9 + $0x1d8] sm:$0xff]
    %v1389 = vld [vmem:[#allocation9 + $0x1e0] sm:$0xff]
    %v1390 = vld [vmem:[#allocation9 + $0x1e8] sm:$0xff]
    %v1391 = vld [vmem:[#allocation9 + $0x1f0] sm:$0xff]
    %v1392 = vld [vmem:[#allocation9 + $0x1f8] sm:$0xff]
    %v1393 = vld [vmem:[#allocation9 + $0x200] sm:$0xff]
    %v1394 = vld [vmem:[#allocation9 + $0x208] sm:$0xff]
    %v1395 = vld [vmem:[#allocation9 + $0x210] sm:$0xff]
    %v1396 = vld [vmem:[#allocation9 + $0x218] sm:$0xff]
    %v1397 = vld [vmem:[#allocation9 + $0x220] sm:$0xff]
    %v1398 = vld [vmem:[#allocation9 + $0x228] sm:$0xff]
    %v1399 = vld [vmem:[#allocation9 + $0x230] sm:$0xff]
    %v1400 = vld [vmem:[#allocation9 + $0x238] sm:$0xff]
    %v1401 = vld [vmem:[#allocation9 + $0x240] sm:$0xff]
    %v1402 = vld [vmem:[#allocation9 + $0x248] sm:$0xff]
    %v1403 = vld [vmem:[#allocation9 + $0x250] sm:$0xff]
    %v1404 = vld [vmem:[#allocation9 + $0x258] sm:$0xff]
    %v1405 = vld [vmem:[#allocation9 + $0x260] sm:$0xff]
    %v1406 = vld [vmem:[#allocation9 + $0x268] sm:$0xff]
    %v1407 = vld [vmem:[#allocation9 + $0x270] sm:$0xff]
    %v1408 = vld [vmem:[#allocation9 + $0x278] sm:$0xff]
    %v1409 = vld [vmem:[#allocation9 + $0x280] sm:$0xff]
    %v1410 = vld [vmem:[#allocation9 + $0x288] sm:$0xff]
    %v1411 = vld [vmem:[#allocation9 + $0x290] sm:$0xff]
    %v1412 = vld [vmem:[#allocation9 + $0x298] sm:$0xff]
    %v1413 = vld [vmem:[#allocation9 + $0x2a0] sm:$0xff]
    %v1414 = vld [vmem:[#allocation9 + $0x2a8] sm:$0xff]
    %v1415 = vld [vmem:[#allocation9 + $0x2b0] sm:$0xff]
    %v1416 = vld [vmem:[#allocation9 + $0x2b8] sm:$0xff]
    %v1417 = vld [vmem:[#allocation9 + $0x2c0] sm:$0xff]
    %v1418 = vld [vmem:[#allocation9 + $0x2c8] sm:$0xff]
    %v1419 = vld [vmem:[#allocation9 + $0x2d0] sm:$0xff]
    %v1420 = vld [vmem:[#allocation9 + $0x2d8] sm:$0xff]
    %v1421 = vld [vmem:[#allocation9 + $0x2e0] sm:$0xff]
    %v1422 = vld [vmem:[#allocation9 + $0x2e8] sm:$0xff]
    %v1423 = vld [vmem:[#allocation9 + $0x2f0] sm:$0xff]
    %v1424 = vld [vmem:[#allocation9 + $0x2f8] sm:$0xff]
    %v1425 = vld [vmem:[#allocation9 + $0x300] sm:$0xff]
    %v1426 = vld [vmem:[#allocation9 + $0x308] sm:$0xff]
    %v1427 = vld [vmem:[#allocation9 + $0x310] sm:$0xff]
    %v1428 = vld [vmem:[#allocation9 + $0x318] sm:$0xff]
    %v1429 = vld [vmem:[#allocation9 + $0x320] sm:$0xff]
    %v1430 = vld [vmem:[#allocation9 + $0x328] sm:$0xff]
    %v1431 = vld [vmem:[#allocation9 + $0x330] sm:$0xff]
    %v1432 = vld [vmem:[#allocation9 + $0x338] sm:$0xff]
    %v1433 = vld [vmem:[#allocation9 + $0x340] sm:$0xff]
    %v1434 = vld [vmem:[#allocation9 + $0x348] sm:$0xff]
    %v1435 = vld [vmem:[#allocation9 + $0x350] sm:$0xff]
    %v1436 = vld [vmem:[#allocation9 + $0x358] sm:$0xff]
    %v1437 = vld [vmem:[#allocation9 + $0x360] sm:$0xff]
    %v1438 = vld [vmem:[#allocation9 + $0x368] sm:$0xff]
    %v1439 = vld [vmem:[#allocation9 + $0x370] sm:$0xff]
    %v1440 = vld [vmem:[#allocation9 + $0x378] sm:$0xff]
    %v1441 = vld [vmem:[#allocation9 + $0x380] sm:$0xff]
    %v1442 = vld [vmem:[#allocation9 + $0x388] sm:$0xff]
    %v1443 = vld [vmem:[#allocation9 + $0x390] sm:$0xff]
    %v1444 = vld [vmem:[#allocation9 + $0x398] sm:$0xff]
    %v1445 = vld [vmem:[#allocation9 + $0x3a0] sm:$0xff]
    %v1446 = vld [vmem:[#allocation9 + $0x3a8] sm:$0xff]
    %v1447 = vld [vmem:[#allocation9 + $0x3b0] sm:$0xff]
    %v1448 = vld [vmem:[#allocation9 + $0x3b8] sm:$0xff]
    %v1449 = vld [vmem:[#allocation9 + $0x3c0] sm:$0xff]
    %v1450 = vld [vmem:[#allocation9 + $0x3c8] sm:$0xff]
    %v1451 = vld [vmem:[#allocation9 + $0x3d0] sm:$0xff]
    %v1452 = vld [vmem:[#allocation9 + $0x3d8] sm:$0xff]
    %v1453 = vld [vmem:[#allocation9 + $0x3e0] sm:$0xff]
    %v1454 = vld [vmem:[#allocation9 + $0x3e8] sm:$0xff]
    %v1455 = vld [vmem:[#allocation9 + $0x3f0] sm:$0xff]
    %v1456 = vld [vmem:[#allocation9 + $0x3f8] sm:$0xff]
    %v1457 = vld [vmem:[#allocation10] sm:$0xff]
    %v1459 = vperm.slane %v1457, 0
    %v1460 = vperm.slane %v1457, 1
    %v1461 = vperm.slane %v1457, 2
    %v1462 = vperm.slane %v1457, 3
    %v1463 = vperm.slane %v1457, 4
    %v1464 = vperm.slane %v1457, 5
    %v1465 = vperm.slane %v1457, 6
    %v1466 = vperm.slane %v1457, 7
    %1477 = vst [vmem:[#allocation1] ss:$4 sm:$0xff] %v114
    %s1478 = scalar_lea.vmem [#allocation1], 32
    %1479 = vst [vmem:[%s1478] ss:$4 sm:$0xff] %v115
    %v1480 = vld.sshfl [vmem:[#allocation1] sm:$0xff pattern:$0x73625140]
    %v1481 = vld.sshfl [vmem:[#allocation1 + $0x8] sm:$0xff pattern:$0x73625140]
    %v1482 = vld.sshfl [vmem:[#allocation1 + $0x10] sm:$0xff pattern:$0x73625140]
    %v1483 = vld.sshfl [vmem:[#allocation1 + $0x18] sm:$0xff pattern:$0x73625140]
    %v1484 = vld.sshfl [vmem:[#allocation1 + $0x20] sm:$0xff pattern:$0x73625140]
    %v1485 = vld.sshfl [vmem:[#allocation1 + $0x28] sm:$0xff pattern:$0x73625140]
    %v1486 = vld.sshfl [vmem:[#allocation1 + $0x30] sm:$0xff pattern:$0x73625140]
    %v1487 = vld.sshfl [vmem:[#allocation1 + $0x38] sm:$0xff pattern:$0x73625140]
    %v1496 = vsub.f32 %v1459, %v1480
    %v1497 = vsub.f32 %v1460, %v1481
    %v1498 = vsub.f32 %v1461, %v1482
    %v1499 = vsub.f32 %v1462, %v1483
    %v1500 = vsub.f32 %v1463, %v1484
    %v1501 = vsub.f32 %v1464, %v1485
    %v1502 = vsub.f32 %v1465, %v1486
    %v1503 = vsub.f32 %v1466, %v1487
    %v1512 = vrot.slane %v1497, 7
    %v1513 = vrot.slane %v1498, 6
    %v1514 = vrot.slane %v1499, 5
    %v1515 = vrot.slane %v1500, 4
    %v1516 = vrot.slane %v1501, 3
    %v1517 = vrot.slane %v1502, 2
    %v1518 = vrot.slane %v1503, 1
    %v1519 = vsel %vm1140, %v1496, %v1512
    %vm1520 = vcmask 1042434
    %v1521 = vsel %vm1520, %v1513, %v1514
    %vm1522 = vcmask 1041408
    %v1523 = vsel %vm1522, %v1519, %v1521
    %vm1524 = vcmask 1044484
    %v1525 = vsel %vm1524, %v1515, %v1516
    %vm1526 = vcmask 1046534
    %v1527 = vsel %vm1526, %v1517, %v1518
    %vm1528 = vcmask 1045508
    %v1529 = vsel %vm1528, %v1525, %v1527
    %vm1530 = vcmask 1043456
    %v1531 = vsel %vm1530, %v1523, %v1529
    %v1532 = vsel %vm1142, %v1496, %v1512
    %vm1533 = vcmask 1043459
    %v1534 = vsel %vm1533, %v1513, %v1514
    %vm1535 = vcmask 1042433
    %v1536 = vsel %vm1535, %v1532, %v1534
    %vm1537 = vcmask 1045509
    %v1538 = vsel %vm1537, %v1515, %v1516
    %vm1539 = vcmask 1046528
    %v1540 = vsel %vm1539, %v1518, %v1517
    %vm1541 = vcmask 1046533
    %v1542 = vsel %vm1541, %v1538, %v1540
    %vm1543 = vcmask 1044481
    %v1544 = vsel %vm1543, %v1536, %v1542
    %v1545 = vrot.slane %v1544, 1
    %v1546 = vperm.slane %v1531, 0
    %v1547 = vperm.slane %v1531, 1
    %v1548 = vperm.slane %v1531, 2
    %v1549 = vperm.slane %v1531, 3
    %v1550 = vperm.slane %v1531, 4
    %v1551 = vperm.slane %v1531, 5
    %v1552 = vperm.slane %v1531, 6
    %v1553 = vperm.slane %v1531, 7
    %v1554 = vperm.slane %v1545, 0
    %v1555 = vperm.slane %v1545, 1
    %v1556 = vperm.slane %v1545, 2
    %v1557 = vperm.slane %v1545, 3
    %v1558 = vperm.slane %v1545, 4
    %v1559 = vperm.slane %v1545, 5
    %v1560 = vperm.slane %v1545, 6
    %v1561 = vperm.slane %v1545, 7
    %v1706 = vunpack.c.l.b16 %v1329
    %v1707 = vunpack.c.h.b16 %v1329
    %v1708 = vunpack.c.l.b16 %v1330
    %v1709 = vunpack.c.h.b16 %v1330
    %v1710 = vunpack.c.l.b16 %v1331
    %v1711 = vunpack.c.h.b16 %v1331
    %v1712 = vunpack.c.l.b16 %v1332
    %v1713 = vunpack.c.h.b16 %v1332
    %v1714 = vunpack.c.l.b16 %v1333
    %v1715 = vunpack.c.h.b16 %v1333
    %v1716 = vunpack.c.l.b16 %v1334
    %v1717 = vunpack.c.h.b16 %v1334
    %v1718 = vunpack.c.l.b16 %v1335
    %v1719 = vunpack.c.h.b16 %v1335
    %v1720 = vunpack.c.l.b16 %v1336
    %v1721 = vunpack.c.h.b16 %v1336
    %v1722 = vunpack.c.l.b16 %v1337
    %v1723 = vunpack.c.h.b16 %v1337
    %v1724 = vunpack.c.l.b16 %v1338
    %v1725 = vunpack.c.h.b16 %v1338
    %v1726 = vunpack.c.l.b16 %v1339
    %v1727 = vunpack.c.h.b16 %v1339
    %v1728 = vunpack.c.l.b16 %v1340
    %v1729 = vunpack.c.h.b16 %v1340
    %v1730 = vunpack.c.l.b16 %v1341
    %v1731 = vunpack.c.h.b16 %v1341
    %v1732 = vunpack.c.l.b16 %v1342
    %v1733 = vunpack.c.h.b16 %v1342
    %v1734 = vunpack.c.l.b16 %v1343
    %v1735 = vunpack.c.h.b16 %v1343
    %v1736 = vunpack.c.l.b16 %v1344
    %v1737 = vunpack.c.h.b16 %v1344
    %v1738 = vunpack.c.l.b16 %v1345
    %v1739 = vunpack.c.h.b16 %v1345
    %v1740 = vunpack.c.l.b16 %v1346
    %v1741 = vunpack.c.h.b16 %v1346
    %v1742 = vunpack.c.l.b16 %v1347
    %v1743 = vunpack.c.h.b16 %v1347
    %v1744 = vunpack.c.l.b16 %v1348
    %v1745 = vunpack.c.h.b16 %v1348
    %v1746 = vunpack.c.l.b16 %v1349
    %v1747 = vunpack.c.h.b16 %v1349
    %v1748 = vunpack.c.l.b16 %v1350
    %v1749 = vunpack.c.h.b16 %v1350
    %v1750 = vunpack.c.l.b16 %v1351
    %v1751 = vunpack.c.h.b16 %v1351
    %v1752 = vunpack.c.l.b16 %v1352
    %v1753 = vunpack.c.h.b16 %v1352
    %v1754 = vunpack.c.l.b16 %v1353
    %v1755 = vunpack.c.h.b16 %v1353
    %v1756 = vunpack.c.l.b16 %v1354
    %v1757 = vunpack.c.h.b16 %v1354
    %v1758 = vunpack.c.l.b16 %v1355
    %v1759 = vunpack.c.h.b16 %v1355
    %v1760 = vunpack.c.l.b16 %v1356
    %v1761 = vunpack.c.h.b16 %v1356
    %v1762 = vunpack.c.l.b16 %v1357
    %v1763 = vunpack.c.h.b16 %v1357
    %v1764 = vunpack.c.l.b16 %v1358
    %v1765 = vunpack.c.h.b16 %v1358
    %v1766 = vunpack.c.l.b16 %v1359
    %v1767 = vunpack.c.h.b16 %v1359
    %v1768 = vunpack.c.l.b16 %v1360
    %v1769 = vunpack.c.h.b16 %v1360
    %v1770 = vunpack.c.l.b16 %v1361
    %v1771 = vunpack.c.h.b16 %v1361
    %v1772 = vunpack.c.l.b16 %v1362
    %v1773 = vunpack.c.h.b16 %v1362
    %v1774 = vunpack.c.l.b16 %v1363
    %v1775 = vunpack.c.h.b16 %v1363
    %v1776 = vunpack.c.l.b16 %v1364
    %v1777 = vunpack.c.h.b16 %v1364
    %v1778 = vunpack.c.l.b16 %v1365
    %v1779 = vunpack.c.h.b16 %v1365
    %v1780 = vunpack.c.l.b16 %v1366
    %v1781 = vunpack.c.h.b16 %v1366
    %v1782 = vunpack.c.l.b16 %v1367
    %v1783 = vunpack.c.h.b16 %v1367
    %v1784 = vunpack.c.l.b16 %v1368
    %v1785 = vunpack.c.h.b16 %v1368
    %v1786 = vunpack.c.l.b16 %v1369
    %v1787 = vunpack.c.h.b16 %v1369
    %v1788 = vunpack.c.l.b16 %v1370
    %v1789 = vunpack.c.h.b16 %v1370
    %v1790 = vunpack.c.l.b16 %v1371
    %v1791 = vunpack.c.h.b16 %v1371
    %v1792 = vunpack.c.l.b16 %v1372
    %v1793 = vunpack.c.h.b16 %v1372
    %v1794 = vunpack.c.l.b16 %v1373
    %v1795 = vunpack.c.h.b16 %v1373
    %v1796 = vunpack.c.l.b16 %v1374
    %v1797 = vunpack.c.h.b16 %v1374
    %v1798 = vunpack.c.l.b16 %v1375
    %v1799 = vunpack.c.h.b16 %v1375
    %v1800 = vunpack.c.l.b16 %v1376
    %v1801 = vunpack.c.h.b16 %v1376
    %v1802 = vunpack.c.l.b16 %v1377
    %v1803 = vunpack.c.h.b16 %v1377
    %v1804 = vunpack.c.l.b16 %v1378
    %v1805 = vunpack.c.h.b16 %v1378
    %v1806 = vunpack.c.l.b16 %v1379
    %v1807 = vunpack.c.h.b16 %v1379
    %v1808 = vunpack.c.l.b16 %v1380
    %v1809 = vunpack.c.h.b16 %v1380
    %v1810 = vunpack.c.l.b16 %v1381
    %v1811 = vunpack.c.h.b16 %v1381
    %v1812 = vunpack.c.l.b16 %v1382
    %v1813 = vunpack.c.h.b16 %v1382
    %v1814 = vunpack.c.l.b16 %v1383
    %v1815 = vunpack.c.h.b16 %v1383
    %v1816 = vunpack.c.l.b16 %v1384
    %v1817 = vunpack.c.h.b16 %v1384
    %v1818 = vunpack.c.l.b16 %v1385
    %v1819 = vunpack.c.h.b16 %v1385
    %v1820 = vunpack.c.l.b16 %v1386
    %v1821 = vunpack.c.h.b16 %v1386
    %v1822 = vunpack.c.l.b16 %v1387
    %v1823 = vunpack.c.h.b16 %v1387
    %v1824 = vunpack.c.l.b16 %v1388
    %v1825 = vunpack.c.h.b16 %v1388
    %v1826 = vunpack.c.l.b16 %v1389
    %v1827 = vunpack.c.h.b16 %v1389
    %v1828 = vunpack.c.l.b16 %v1390
    %v1829 = vunpack.c.h.b16 %v1390
    %v1830 = vunpack.c.l.b16 %v1391
    %v1831 = vunpack.c.h.b16 %v1391
    %v1832 = vunpack.c.l.b16 %v1392
    %v1833 = vunpack.c.h.b16 %v1392
    %v1834 = vunpack.c.l.b16 %v1393
    %v1835 = vunpack.c.h.b16 %v1393
    %v1836 = vunpack.c.l.b16 %v1394
    %v1837 = vunpack.c.h.b16 %v1394
    %v1838 = vunpack.c.l.b16 %v1395
    %v1839 = vunpack.c.h.b16 %v1395
    %v1840 = vunpack.c.l.b16 %v1396
    %v1841 = vunpack.c.h.b16 %v1396
    %v1842 = vunpack.c.l.b16 %v1397
    %v1843 = vunpack.c.h.b16 %v1397
    %v1844 = vunpack.c.l.b16 %v1398
    %v1845 = vunpack.c.h.b16 %v1398
    %v1846 = vunpack.c.l.b16 %v1399
    %v1847 = vunpack.c.h.b16 %v1399
    %v1848 = vunpack.c.l.b16 %v1400
    %v1849 = vunpack.c.h.b16 %v1400
    %v1850 = vunpack.c.l.b16 %v1401
    %v1851 = vunpack.c.h.b16 %v1401
    %v1852 = vunpack.c.l.b16 %v1402
    %v1853 = vunpack.c.h.b16 %v1402
    %v1854 = vunpack.c.l.b16 %v1403
    %v1855 = vunpack.c.h.b16 %v1403
    %v1856 = vunpack.c.l.b16 %v1404
    %v1857 = vunpack.c.h.b16 %v1404
    %v1858 = vunpack.c.l.b16 %v1405
    %v1859 = vunpack.c.h.b16 %v1405
    %v1860 = vunpack.c.l.b16 %v1406
    %v1861 = vunpack.c.h.b16 %v1406
    %v1862 = vunpack.c.l.b16 %v1407
    %v1863 = vunpack.c.h.b16 %v1407
    %v1864 = vunpack.c.l.b16 %v1408
    %v1865 = vunpack.c.h.b16 %v1408
    %v1866 = vunpack.c.l.b16 %v1409
    %v1867 = vunpack.c.h.b16 %v1409
    %v1868 = vunpack.c.l.b16 %v1410
    %v1869 = vunpack.c.h.b16 %v1410
    %v1870 = vunpack.c.l.b16 %v1411
    %v1871 = vunpack.c.h.b16 %v1411
    %v1872 = vunpack.c.l.b16 %v1412
    %v1873 = vunpack.c.h.b16 %v1412
    %v1874 = vunpack.c.l.b16 %v1413
    %v1875 = vunpack.c.h.b16 %v1413
    %v1876 = vunpack.c.l.b16 %v1414
    %v1877 = vunpack.c.h.b16 %v1414
    %v1878 = vunpack.c.l.b16 %v1415
    %v1879 = vunpack.c.h.b16 %v1415
    %v1880 = vunpack.c.l.b16 %v1416
    %v1881 = vunpack.c.h.b16 %v1416
    %v1882 = vunpack.c.l.b16 %v1417
    %v1883 = vunpack.c.h.b16 %v1417
    %v1884 = vunpack.c.l.b16 %v1418
    %v1885 = vunpack.c.h.b16 %v1418
    %v1886 = vunpack.c.l.b16 %v1419
    %v1887 = vunpack.c.h.b16 %v1419
    %v1888 = vunpack.c.l.b16 %v1420
    %v1889 = vunpack.c.h.b16 %v1420
    %v1890 = vunpack.c.l.b16 %v1421
    %v1891 = vunpack.c.h.b16 %v1421
    %v1892 = vunpack.c.l.b16 %v1422
    %v1893 = vunpack.c.h.b16 %v1422
    %v1894 = vunpack.c.l.b16 %v1423
    %v1895 = vunpack.c.h.b16 %v1423
    %v1896 = vunpack.c.l.b16 %v1424
    %v1897 = vunpack.c.h.b16 %v1424
    %v1898 = vunpack.c.l.b16 %v1425
    %v1899 = vunpack.c.h.b16 %v1425
    %v1900 = vunpack.c.l.b16 %v1426
    %v1901 = vunpack.c.h.b16 %v1426
    %v1902 = vunpack.c.l.b16 %v1427
    %v1903 = vunpack.c.h.b16 %v1427
    %v1904 = vunpack.c.l.b16 %v1428
    %v1905 = vunpack.c.h.b16 %v1428
    %v1906 = vunpack.c.l.b16 %v1429
    %v1907 = vunpack.c.h.b16 %v1429
    %v1908 = vunpack.c.l.b16 %v1430
    %v1909 = vunpack.c.h.b16 %v1430
    %v1910 = vunpack.c.l.b16 %v1431
    %v1911 = vunpack.c.h.b16 %v1431
    %v1912 = vunpack.c.l.b16 %v1432
    %v1913 = vunpack.c.h.b16 %v1432
    %v1914 = vunpack.c.l.b16 %v1433
    %v1915 = vunpack.c.h.b16 %v1433
    %v1916 = vunpack.c.l.b16 %v1434
    %v1917 = vunpack.c.h.b16 %v1434
    %v1918 = vunpack.c.l.b16 %v1435
    %v1919 = vunpack.c.h.b16 %v1435
    %v1920 = vunpack.c.l.b16 %v1436
    %v1921 = vunpack.c.h.b16 %v1436
    %v1922 = vunpack.c.l.b16 %v1437
    %v1923 = vunpack.c.h.b16 %v1437
    %v1924 = vunpack.c.l.b16 %v1438
    %v1925 = vunpack.c.h.b16 %v1438
    %v1926 = vunpack.c.l.b16 %v1439
    %v1927 = vunpack.c.h.b16 %v1439
    %v1928 = vunpack.c.l.b16 %v1440
    %v1929 = vunpack.c.h.b16 %v1440
    %v1930 = vunpack.c.l.b16 %v1441
    %v1931 = vunpack.c.h.b16 %v1441
    %v1932 = vunpack.c.l.b16 %v1442
    %v1933 = vunpack.c.h.b16 %v1442
    %v1934 = vunpack.c.l.b16 %v1443
    %v1935 = vunpack.c.h.b16 %v1443
    %v1936 = vunpack.c.l.b16 %v1444
    %v1937 = vunpack.c.h.b16 %v1444
    %v1938 = vunpack.c.l.b16 %v1445
    %v1939 = vunpack.c.h.b16 %v1445
    %v1940 = vunpack.c.l.b16 %v1446
    %v1941 = vunpack.c.h.b16 %v1446
    %v1942 = vunpack.c.l.b16 %v1447
    %v1943 = vunpack.c.h.b16 %v1447
    %v1944 = vunpack.c.l.b16 %v1448
    %v1945 = vunpack.c.h.b16 %v1448
    %v1946 = vunpack.c.l.b16 %v1449
    %v1947 = vunpack.c.h.b16 %v1449
    %v1948 = vunpack.c.l.b16 %v1450
    %v1949 = vunpack.c.h.b16 %v1450
    %v1950 = vunpack.c.l.b16 %v1451
    %v1951 = vunpack.c.h.b16 %v1451
    %v1952 = vunpack.c.l.b16 %v1452
    %v1953 = vunpack.c.h.b16 %v1452
    %v1954 = vunpack.c.l.b16 %v1453
    %v1955 = vunpack.c.h.b16 %v1453
    %v1956 = vunpack.c.l.b16 %v1454
    %v1957 = vunpack.c.h.b16 %v1454
    %v1958 = vunpack.c.l.b16 %v1455
    %v1959 = vunpack.c.h.b16 %v1455
    %v1960 = vunpack.c.l.b16 %v1456
    %v1961 = vunpack.c.h.b16 %v1456
    %v1962 = vpack.c.b16 %v1714, %v1706
    %v1963 = vpack.c.b16 %v1715, %v1707
    %v1964 = vpack.c.b16 %v1716, %v1708
    %v1965 = vpack.c.b16 %v1717, %v1709
    %v1966 = vpack.c.b16 %v1718, %v1710
    %v1967 = vpack.c.b16 %v1719, %v1711
    %v1968 = vpack.c.b16 %v1720, %v1712
    %v1969 = vpack.c.b16 %v1721, %v1713
    %v1970 = vpack.c.b16 %v1730, %v1722
    %v1971 = vpack.c.b16 %v1731, %v1723
    %v1972 = vpack.c.b16 %v1732, %v1724
    %v1973 = vpack.c.b16 %v1733, %v1725
    %v1974 = vpack.c.b16 %v1734, %v1726
    %v1975 = vpack.c.b16 %v1735, %v1727
    %v1976 = vpack.c.b16 %v1736, %v1728
    %v1977 = vpack.c.b16 %v1737, %v1729
    %v1978 = vpack.c.b16 %v1746, %v1738
    %v1979 = vpack.c.b16 %v1747, %v1739
    %v1980 = vpack.c.b16 %v1748, %v1740
    %v1981 = vpack.c.b16 %v1749, %v1741
    %v1982 = vpack.c.b16 %v1750, %v1742
    %v1983 = vpack.c.b16 %v1751, %v1743
    %v1984 = vpack.c.b16 %v1752, %v1744
    %v1985 = vpack.c.b16 %v1753, %v1745
    %v1986 = vpack.c.b16 %v1762, %v1754
    %v1987 = vpack.c.b16 %v1763, %v1755
    %v1988 = vpack.c.b16 %v1764, %v1756
    %v1989 = vpack.c.b16 %v1765, %v1757
    %v1990 = vpack.c.b16 %v1766, %v1758
    %v1991 = vpack.c.b16 %v1767, %v1759
    %v1992 = vpack.c.b16 %v1768, %v1760
    %v1993 = vpack.c.b16 %v1769, %v1761
    %v1994 = vpack.c.b16 %v1778, %v1770
    %v1995 = vpack.c.b16 %v1779, %v1771
    %v1996 = vpack.c.b16 %v1780, %v1772
    %v1997 = vpack.c.b16 %v1781, %v1773
    %v1998 = vpack.c.b16 %v1782, %v1774
    %v1999 = vpack.c.b16 %v1783, %v1775
    %v2000 = vpack.c.b16 %v1784, %v1776
    %v2001 = vpack.c.b16 %v1785, %v1777
    %v2002 = vpack.c.b16 %v1794, %v1786
    %v2003 = vpack.c.b16 %v1795, %v1787
    %v2004 = vpack.c.b16 %v1796, %v1788
    %v2005 = vpack.c.b16 %v1797, %v1789
    %v2006 = vpack.c.b16 %v1798, %v1790
    %v2007 = vpack.c.b16 %v1799, %v1791
    %v2008 = vpack.c.b16 %v1800, %v1792
    %v2009 = vpack.c.b16 %v1801, %v1793
    %v2010 = vpack.c.b16 %v1810, %v1802
    %v2011 = vpack.c.b16 %v1811, %v1803
    %v2012 = vpack.c.b16 %v1812, %v1804
    %v2013 = vpack.c.b16 %v1813, %v1805
    %v2014 = vpack.c.b16 %v1814, %v1806
    %v2015 = vpack.c.b16 %v1815, %v1807
    %v2016 = vpack.c.b16 %v1816, %v1808
    %v2017 = vpack.c.b16 %v1817, %v1809
    %v2018 = vpack.c.b16 %v1826, %v1818
    %v2019 = vpack.c.b16 %v1827, %v1819
    %v2020 = vpack.c.b16 %v1828, %v1820
    %v2021 = vpack.c.b16 %v1829, %v1821
    %v2022 = vpack.c.b16 %v1830, %v1822
    %v2023 = vpack.c.b16 %v1831, %v1823
    %v2024 = vpack.c.b16 %v1832, %v1824
    %v2025 = vpack.c.b16 %v1833, %v1825
    %v2026 = vpack.c.b16 %v1842, %v1834
    %v2027 = vpack.c.b16 %v1843, %v1835
    %v2028 = vpack.c.b16 %v1844, %v1836
    %v2029 = vpack.c.b16 %v1845, %v1837
    %v2030 = vpack.c.b16 %v1846, %v1838
    %v2031 = vpack.c.b16 %v1847, %v1839
    %v2032 = vpack.c.b16 %v1848, %v1840
    %v2033 = vpack.c.b16 %v1849, %v1841
    %v2034 = vpack.c.b16 %v1858, %v1850
    %v2035 = vpack.c.b16 %v1859, %v1851
    %v2036 = vpack.c.b16 %v1860, %v1852
    %v2037 = vpack.c.b16 %v1861, %v1853
    %v2038 = vpack.c.b16 %v1862, %v1854
    %v2039 = vpack.c.b16 %v1863, %v1855
    %v2040 = vpack.c.b16 %v1864, %v1856
    %v2041 = vpack.c.b16 %v1865, %v1857
    %v2042 = vpack.c.b16 %v1874, %v1866
    %v2043 = vpack.c.b16 %v1875, %v1867
    %v2044 = vpack.c.b16 %v1876, %v1868
    %v2045 = vpack.c.b16 %v1877, %v1869
    %v2046 = vpack.c.b16 %v1878, %v1870
    %v2047 = vpack.c.b16 %v1879, %v1871
    %v2048 = vpack.c.b16 %v1880, %v1872
    %v2049 = vpack.c.b16 %v1881, %v1873
    %v2050 = vpack.c.b16 %v1890, %v1882
    %v2051 = vpack.c.b16 %v1891, %v1883
    %v2052 = vpack.c.b16 %v1892, %v1884
    %v2053 = vpack.c.b16 %v1893, %v1885
    %v2054 = vpack.c.b16 %v1894, %v1886
    %v2055 = vpack.c.b16 %v1895, %v1887
    %v2056 = vpack.c.b16 %v1896, %v1888
    %v2057 = vpack.c.b16 %v1897, %v1889
    %v2058 = vpack.c.b16 %v1906, %v1898
    %v2059 = vpack.c.b16 %v1907, %v1899
    %v2060 = vpack.c.b16 %v1908, %v1900
    %v2061 = vpack.c.b16 %v1909, %v1901
    %v2062 = vpack.c.b16 %v1910, %v1902
    %v2063 = vpack.c.b16 %v1911, %v1903
    %v2064 = vpack.c.b16 %v1912, %v1904
    %v2065 = vpack.c.b16 %v1913, %v1905
    %v2066 = vpack.c.b16 %v1922, %v1914
    %v2067 = vpack.c.b16 %v1923, %v1915
    %v2068 = vpack.c.b16 %v1924, %v1916
    %v2069 = vpack.c.b16 %v1925, %v1917
    %v2070 = vpack.c.b16 %v1926, %v1918
    %v2071 = vpack.c.b16 %v1927, %v1919
    %v2072 = vpack.c.b16 %v1928, %v1920
    %v2073 = vpack.c.b16 %v1929, %v1921
    %v2074 = vpack.c.b16 %v1938, %v1930
    %v2075 = vpack.c.b16 %v1939, %v1931
    %v2076 = vpack.c.b16 %v1940, %v1932
    %v2077 = vpack.c.b16 %v1941, %v1933
    %v2078 = vpack.c.b16 %v1942, %v1934
    %v2079 = vpack.c.b16 %v1943, %v1935
    %v2080 = vpack.c.b16 %v1944, %v1936
    %v2081 = vpack.c.b16 %v1945, %v1937
    %v2082 = vpack.c.b16 %v1954, %v1946
    %v2083 = vpack.c.b16 %v1955, %v1947
    %v2084 = vpack.c.b16 %v1956, %v1948
    %v2085 = vpack.c.b16 %v1957, %v1949
    %v2086 = vpack.c.b16 %v1958, %v1950
    %v2087 = vpack.c.b16 %v1959, %v1951
    %v2088 = vpack.c.b16 %v1960, %v1952
    %v2089 = vpack.c.b16 %v1961, %v1953
    %2218 = vmatpush.bf16.msra.mxu0 %v2018
    %2219 = vmatpush.bf16.msra.mxu0 %v2010
    %2220 = vmatpush.bf16.msra.mxu0 %v2002
    %2221 = vmatpush.bf16.msra.mxu0 %v1994
    %2222 = vmatpush.bf16.msra.mxu0 %v1986
    %2223 = vmatpush.bf16.msra.mxu0 %v1978
    %2224 = vmatpush.bf16.msra.mxu0 %v1970
    %2225 = vmatpush.bf16.msra.mxu0 %v1962
    %2226 = vmatmul.bf16.gmra.mxu0 %v1325
    %v2227 = vpop.f32.mrf.mxu0
    %v2228 = vadd.f32 %v1546, %v2227
    %v2229 = vpop.f32.mrf.mxu0
    %v2230 = vadd.f32 %v1546, %v2229
    %2231 = vmatmul.bf16.gmra.mxu0 %v1327
    %v2232 = vpop.f32.mrf.mxu0
    %v2233 = vadd.f32 %v1554, %v2232
    %v2234 = vpop.f32.mrf.mxu0
    %v2235 = vadd.f32 %v1554, %v2234
    %2236 = vdwg.mxu0
    %2237 = vmatpush.bf16.msra.mxu0 %v2082
    %2238 = vmatpush.bf16.msra.mxu0 %v2074
    %2239 = vmatpush.bf16.msra.mxu0 %v2066
    %2240 = vmatpush.bf16.msra.mxu0 %v2058
    %2241 = vmatpush.bf16.msra.mxu0 %v2050
    %2242 = vmatpush.bf16.msra.mxu0 %v2042
    %2243 = vmatpush.bf16.msra.mxu0 %v2034
    %2244 = vmatpush.bf16.msra.mxu0 %v2026
    %2245 = vmatmul.bf16.gmra.mxu0 %v1326
    %v2246 = vpop.f32.mrf.mxu0
    %v2247 = vadd.f32 %v2228, %v2246
    %v2248 = vpop.f32.mrf.mxu0
    %v2249 = vadd.f32 %v2230, %v2248
    %2250 = vmatmul.bf16.gmra.mxu0 %v1328
    %v2251 = vpop.f32.mrf.mxu0
    %v2252 = vadd.f32 %v2233, %v2251
    %v2253 = vpop.f32.mrf.mxu0
    %v2254 = vadd.f32 %v2235, %v2253
    %2255 = vdwg.mxu0
    %2256 = vmatpush.bf16.msra.mxu0 %v2019
    %2257 = vmatpush.bf16.msra.mxu0 %v2011
    %2258 = vmatpush.bf16.msra.mxu0 %v2003
    %2259 = vmatpush.bf16.msra.mxu0 %v1995
    %2260 = vmatpush.bf16.msra.mxu0 %v1987
    %2261 = vmatpush.bf16.msra.mxu0 %v1979
    %2262 = vmatpush.bf16.msra.mxu0 %v1971
    %2263 = vmatpush.bf16.msra.mxu0 %v1963
    %2264 = vmatmul.bf16.gmra.mxu0 %v1325
    %v2265 = vpop.f32.mrf.mxu0
    %v2266 = vadd.f32 %v1547, %v2265
    %v2267 = vpop.f32.mrf.mxu0
    %v2268 = vadd.f32 %v1547, %v2267
    %2269 = vmatmul.bf16.gmra.mxu0 %v1327
    %v2270 = vpop.f32.mrf.mxu0
    %v2271 = vadd.f32 %v1555, %v2270
    %v2272 = vpop.f32.mrf.mxu0
    %v2273 = vadd.f32 %v1555, %v2272
    %2274 = vdwg.mxu0
    %2275 = vmatpush.bf16.msra.mxu0 %v2083
    %2276 = vmatpush.bf16.msra.mxu0 %v2075
    %2277 = vmatpush.bf16.msra.mxu0 %v2067
    %2278 = vmatpush.bf16.msra.mxu0 %v2059
    %2279 = vmatpush.bf16.msra.mxu0 %v2051
    %2280 = vmatpush.bf16.msra.mxu0 %v2043
    %2281 = vmatpush.bf16.msra.mxu0 %v2035
    %2282 = vmatpush.bf16.msra.mxu0 %v2027
    %2283 = vmatmul.bf16.gmra.mxu0 %v1326
    %v2284 = vpop.f32.mrf.mxu0
    %v2285 = vadd.f32 %v2266, %v2284
    %v2286 = vpop.f32.mrf.mxu0
    %v2287 = vadd.f32 %v2268, %v2286
    %2288 = vmatmul.bf16.gmra.mxu0 %v1328
    %v2289 = vpop.f32.mrf.mxu0
    %v2290 = vadd.f32 %v2271, %v2289
    %v2291 = vpop.f32.mrf.mxu0
    %v2292 = vadd.f32 %v2273, %v2291
    %2293 = vdwg.mxu0
    %2294 = vmatpush.bf16.msra.mxu0 %v2020
    %2295 = vmatpush.bf16.msra.mxu0 %v2012
    %2296 = vmatpush.bf16.msra.mxu0 %v2004
    %2297 = vmatpush.bf16.msra.mxu0 %v1996
    %2298 = vmatpush.bf16.msra.mxu0 %v1988
    %2299 = vmatpush.bf16.msra.mxu0 %v1980
    %2300 = vmatpush.bf16.msra.mxu0 %v1972
    %2301 = vmatpush.bf16.msra.mxu0 %v1964
    %2302 = vmatmul.bf16.gmra.mxu0 %v1325
    %v2303 = vpop.f32.mrf.mxu0
    %v2304 = vadd.f32 %v1548, %v2303
    %v2305 = vpop.f32.mrf.mxu0
    %v2306 = vadd.f32 %v1548, %v2305
    %2307 = vmatmul.bf16.gmra.mxu0 %v1327
    %v2308 = vpop.f32.mrf.mxu0
    %v2309 = vadd.f32 %v1556, %v2308
    %v2310 = vpop.f32.mrf.mxu0
    %v2311 = vadd.f32 %v1556, %v2310
    %2312 = vdwg.mxu0
    %2313 = vmatpush.bf16.msra.mxu0 %v2084
    %2314 = vmatpush.bf16.msra.mxu0 %v2076
    %2315 = vmatpush.bf16.msra.mxu0 %v2068
    %2316 = vmatpush.bf16.msra.mxu0 %v2060
    %2317 = vmatpush.bf16.msra.mxu0 %v2052
    %2318 = vmatpush.bf16.msra.mxu0 %v2044
    %2319 = vmatpush.bf16.msra.mxu0 %v2036
    %2320 = vmatpush.bf16.msra.mxu0 %v2028
    %2321 = vmatmul.bf16.gmra.mxu0 %v1326
    %v2322 = vpop.f32.mrf.mxu0
    %v2323 = vadd.f32 %v2304, %v2322
    %v2324 = vpop.f32.mrf.mxu0
    %v2325 = vadd.f32 %v2306, %v2324
    %2326 = vmatmul.bf16.gmra.mxu0 %v1328
    %v2327 = vpop.f32.mrf.mxu0
    %v2328 = vadd.f32 %v2309, %v2327
    %v2329 = vpop.f32.mrf.mxu0
    %v2330 = vadd.f32 %v2311, %v2329
    %2331 = vdwg.mxu0
    %2332 = vmatpush.bf16.msra.mxu0 %v2021
    %2333 = vmatpush.bf16.msra.mxu0 %v2013
    %2334 = vmatpush.bf16.msra.mxu0 %v2005
    %2335 = vmatpush.bf16.msra.mxu0 %v1997
    %2336 = vmatpush.bf16.msra.mxu0 %v1989
    %2337 = vmatpush.bf16.msra.mxu0 %v1981
    %2338 = vmatpush.bf16.msra.mxu0 %v1973
    %2339 = vmatpush.bf16.msra.mxu0 %v1965
    %2340 = vmatmul.bf16.gmra.mxu0 %v1325
    %v2341 = vpop.f32.mrf.mxu0
    %v2342 = vadd.f32 %v1549, %v2341
    %v2343 = vpop.f32.mrf.mxu0
    %v2344 = vadd.f32 %v1549, %v2343
    %2345 = vmatmul.bf16.gmra.mxu0 %v1327
    %v2346 = vpop.f32.mrf.mxu0
    %v2347 = vadd.f32 %v1557, %v2346
    %v2348 = vpop.f32.mrf.mxu0
    %v2349 = vadd.f32 %v1557, %v2348
    %2350 = vdwg.mxu0
    %2351 = vmatpush.bf16.msra.mxu0 %v2085
    %2352 = vmatpush.bf16.msra.mxu0 %v2077
    %2353 = vmatpush.bf16.msra.mxu0 %v2069
    %2354 = vmatpush.bf16.msra.mxu0 %v2061
    %2355 = vmatpush.bf16.msra.mxu0 %v2053
    %2356 = vmatpush.bf16.msra.mxu0 %v2045
    %2357 = vmatpush.bf16.msra.mxu0 %v2037
    %2358 = vmatpush.bf16.msra.mxu0 %v2029
    %2359 = vmatmul.bf16.gmra.mxu0 %v1326
    %v2360 = vpop.f32.mrf.mxu0
    %v2361 = vadd.f32 %v2342, %v2360
    %v2362 = vpop.f32.mrf.mxu0
    %v2363 = vadd.f32 %v2344, %v2362
    %2364 = vmatmul.bf16.gmra.mxu0 %v1328
    %v2365 = vpop.f32.mrf.mxu0
    %v2366 = vadd.f32 %v2347, %v2365
    %v2367 = vpop.f32.mrf.mxu0
    %v2368 = vadd.f32 %v2349, %v2367
    %2369 = vdwg.mxu0
    %2370 = vmatpush.bf16.msra.mxu0 %v2022
    %2371 = vmatpush.bf16.msra.mxu0 %v2014
    %2372 = vmatpush.bf16.msra.mxu0 %v2006
    %2373 = vmatpush.bf16.msra.mxu0 %v1998
    %2374 = vmatpush.bf16.msra.mxu0 %v1990
    %2375 = vmatpush.bf16.msra.mxu0 %v1982
    %2376 = vmatpush.bf16.msra.mxu0 %v1974
    %2377 = vmatpush.bf16.msra.mxu0 %v1966
    %2378 = vmatmul.bf16.gmra.mxu0 %v1325
    %v2379 = vpop.f32.mrf.mxu0
    %v2380 = vadd.f32 %v1550, %v2379
    %v2381 = vpop.f32.mrf.mxu0
    %v2382 = vadd.f32 %v1550, %v2381
    %2383 = vmatmul.bf16.gmra.mxu0 %v1327
    %v2384 = vpop.f32.mrf.mxu0
    %v2385 = vadd.f32 %v1558, %v2384
    %v2386 = vpop.f32.mrf.mxu0
    %v2387 = vadd.f32 %v1558, %v2386
    %2388 = vdwg.mxu0
    %2389 = vmatpush.bf16.msra.mxu0 %v2086
    %2390 = vmatpush.bf16.msra.mxu0 %v2078
    %2391 = vmatpush.bf16.msra.mxu0 %v2070
    %2392 = vmatpush.bf16.msra.mxu0 %v2062
    %2393 = vmatpush.bf16.msra.mxu0 %v2054
    %2394 = vmatpush.bf16.msra.mxu0 %v2046
    %2395 = vmatpush.bf16.msra.mxu0 %v2038
    %2396 = vmatpush.bf16.msra.mxu0 %v2030
    %2397 = vmatmul.bf16.gmra.mxu0 %v1326
    %v2398 = vpop.f32.mrf.mxu0
    %v2399 = vadd.f32 %v2380, %v2398
    %v2400 = vpop.f32.mrf.mxu0
    %v2401 = vadd.f32 %v2382, %v2400
    %2402 = vmatmul.bf16.gmra.mxu0 %v1328
    %v2403 = vpop.f32.mrf.mxu0
    %v2404 = vadd.f32 %v2385, %v2403
    %v2405 = vpop.f32.mrf.mxu0
    %v2406 = vadd.f32 %v2387, %v2405
    %2407 = vdwg.mxu0
    %2408 = vmatpush.bf16.msra.mxu0 %v2023
    %2409 = vmatpush.bf16.msra.mxu0 %v2015
    %2410 = vmatpush.bf16.msra.mxu0 %v2007
    %2411 = vmatpush.bf16.msra.mxu0 %v1999
    %2412 = vmatpush.bf16.msra.mxu0 %v1991
    %2413 = vmatpush.bf16.msra.mxu0 %v1983
    %2414 = vmatpush.bf16.msra.mxu0 %v1975
    %2415 = vmatpush.bf16.msra.mxu0 %v1967
    %2416 = vmatmul.bf16.gmra.mxu0 %v1325
    %v2417 = vpop.f32.mrf.mxu0
    %v2418 = vadd.f32 %v1551, %v2417
    %v2419 = vpop.f32.mrf.mxu0
    %v2420 = vadd.f32 %v1551, %v2419
    %2421 = vmatmul.bf16.gmra.mxu0 %v1327
    %v2422 = vpop.f32.mrf.mxu0
    %v2423 = vadd.f32 %v1559, %v2422
    %v2424 = vpop.f32.mrf.mxu0
    %v2425 = vadd.f32 %v1559, %v2424
    %2426 = vdwg.mxu0
    %2427 = vmatpush.bf16.msra.mxu0 %v2087
    %2428 = vmatpush.bf16.msra.mxu0 %v2079
    %2429 = vmatpush.bf16.msra.mxu0 %v2071
    %2430 = vmatpush.bf16.msra.mxu0 %v2063
    %2431 = vmatpush.bf16.msra.mxu0 %v2055
    %2432 = vmatpush.bf16.msra.mxu0 %v2047
    %2433 = vmatpush.bf16.msra.mxu0 %v2039
    %2434 = vmatpush.bf16.msra.mxu0 %v2031
    %2435 = vmatmul.bf16.gmra.mxu0 %v1326
    %v2436 = vpop.f32.mrf.mxu0
    %v2437 = vadd.f32 %v2418, %v2436
    %v2438 = vpop.f32.mrf.mxu0
    %v2439 = vadd.f32 %v2420, %v2438
    %2440 = vmatmul.bf16.gmra.mxu0 %v1328
    %v2441 = vpop.f32.mrf.mxu0
    %v2442 = vadd.f32 %v2423, %v2441
    %v2443 = vpop.f32.mrf.mxu0
    %v2444 = vadd.f32 %v2425, %v2443
    %2445 = vdwg.mxu0
    %2446 = vmatpush.bf16.msra.mxu0 %v2024
    %2447 = vmatpush.bf16.msra.mxu0 %v2016
    %2448 = vmatpush.bf16.msra.mxu0 %v2008
    %2449 = vmatpush.bf16.msra.mxu0 %v2000
    %2450 = vmatpush.bf16.msra.mxu0 %v1992
    %2451 = vmatpush.bf16.msra.mxu0 %v1984
    %2452 = vmatpush.bf16.msra.mxu0 %v1976
    %2453 = vmatpush.bf16.msra.mxu0 %v1968
    %2454 = vmatmul.bf16.gmra.mxu0 %v1325
    %v2455 = vpop.f32.mrf.mxu0
    %v2456 = vadd.f32 %v1552, %v2455
    %v2457 = vpop.f32.mrf.mxu0
    %v2458 = vadd.f32 %v1552, %v2457
    %2459 = vmatmul.bf16.gmra.mxu0 %v1327
    %v2460 = vpop.f32.mrf.mxu0
    %v2461 = vadd.f32 %v1560, %v2460
    %v2462 = vpop.f32.mrf.mxu0
    %v2463 = vadd.f32 %v1560, %v2462
    %2464 = vdwg.mxu0
    %2465 = vmatpush.bf16.msra.mxu0 %v2088
    %2466 = vmatpush.bf16.msra.mxu0 %v2080
    %2467 = vmatpush.bf16.msra.mxu0 %v2072
    %2468 = vmatpush.bf16.msra.mxu0 %v2064
    %2469 = vmatpush.bf16.msra.mxu0 %v2056
    %2470 = vmatpush.bf16.msra.mxu0 %v2048
    %2471 = vmatpush.bf16.msra.mxu0 %v2040
    %2472 = vmatpush.bf16.msra.mxu0 %v2032
    %2473 = vmatmul.bf16.gmra.mxu0 %v1326
    %v2474 = vpop.f32.mrf.mxu0
    %v2475 = vadd.f32 %v2456, %v2474
    %v2476 = vpop.f32.mrf.mxu0
    %v2477 = vadd.f32 %v2458, %v2476
    %2478 = vmatmul.bf16.gmra.mxu0 %v1328
    %v2479 = vpop.f32.mrf.mxu0
    %v2480 = vadd.f32 %v2461, %v2479
    %v2481 = vpop.f32.mrf.mxu0
    %v2482 = vadd.f32 %v2463, %v2481
    %2483 = vdwg.mxu0
    %2484 = vmatpush.bf16.msra.mxu0 %v2025
    %2485 = vmatpush.bf16.msra.mxu0 %v2017
    %2486 = vmatpush.bf16.msra.mxu0 %v2009
    %2487 = vmatpush.bf16.msra.mxu0 %v2001
    %2488 = vmatpush.bf16.msra.mxu0 %v1993
    %2489 = vmatpush.bf16.msra.mxu0 %v1985
    %2490 = vmatpush.bf16.msra.mxu0 %v1977
    %2491 = vmatpush.bf16.msra.mxu0 %v1969
    %2492 = vmatmul.bf16.gmra.mxu0 %v1325
    %v2493 = vpop.f32.mrf.mxu0
    %v2494 = vadd.f32 %v1553, %v2493
    %v2495 = vpop.f32.mrf.mxu0
    %v2496 = vadd.f32 %v1553, %v2495
    %2497 = vmatmul.bf16.gmra.mxu0 %v1327
    %v2498 = vpop.f32.mrf.mxu0
    %v2499 = vadd.f32 %v1561, %v2498
    %v2500 = vpop.f32.mrf.mxu0
    %v2501 = vadd.f32 %v1561, %v2500
    %2502 = vdwg.mxu0
    %2503 = vmatpush.bf16.msra.mxu0 %v2089
    %2504 = vmatpush.bf16.msra.mxu0 %v2081
    %2505 = vmatpush.bf16.msra.mxu0 %v2073
    %2506 = vmatpush.bf16.msra.mxu0 %v2065
    %2507 = vmatpush.bf16.msra.mxu0 %v2057
    %2508 = vmatpush.bf16.msra.mxu0 %v2049
    %2509 = vmatpush.bf16.msra.mxu0 %v2041
    %2510 = vmatpush.bf16.msra.mxu0 %v2033
    %2511 = vmatmul.bf16.gmra.mxu0 %v1326
    %v2512 = vpop.f32.mrf.mxu0
    %v2513 = vadd.f32 %v2494, %v2512
    %v2514 = vpop.f32.mrf.mxu0
    %v2515 = vadd.f32 %v2496, %v2514
    %2516 = vmatmul.bf16.gmra.mxu0 %v1328
    %v2517 = vpop.f32.mrf.mxu0
    %v2518 = vadd.f32 %v2499, %v2517
    %v2519 = vpop.f32.mrf.mxu0
    %v2520 = vadd.f32 %v2501, %v2519
    %2521 = vdwg.mxu0
    %v2522 = vmul.f32 %v2247, %v2247
    %v2523 = vmul.f32 %v2285, %v2285
    %v2524 = vmul.f32 %v2323, %v2323
    %v2525 = vmul.f32 %v2361, %v2361
    %v2526 = vmul.f32 %v2399, %v2399
    %v2527 = vmul.f32 %v2437, %v2437
    %v2528 = vmul.f32 %v2475, %v2475
    %v2529 = vmul.f32 %v2513, %v2513
    %v2530 = vmul.f32 %v2249, %v2249
    %v2531 = vmul.f32 %v2287, %v2287
    %v2532 = vmul.f32 %v2325, %v2325
    %v2533 = vmul.f32 %v2363, %v2363
    %v2534 = vmul.f32 %v2401, %v2401
    %v2535 = vmul.f32 %v2439, %v2439
    %v2536 = vmul.f32 %v2477, %v2477
    %v2537 = vmul.f32 %v2515, %v2515
    %v2538 = vmul.f32 %v2252, %v2252
    %v2539 = vmul.f32 %v2290, %v2290
    %v2540 = vmul.f32 %v2328, %v2328
    %v2541 = vmul.f32 %v2366, %v2366
    %v2542 = vmul.f32 %v2404, %v2404
    %v2543 = vmul.f32 %v2442, %v2442
    %v2544 = vmul.f32 %v2480, %v2480
    %v2545 = vmul.f32 %v2518, %v2518
    %v2546 = vmul.f32 %v2254, %v2254
    %v2547 = vmul.f32 %v2292, %v2292
    %v2548 = vmul.f32 %v2330, %v2330
    %v2549 = vmul.f32 %v2368, %v2368
    %v2550 = vmul.f32 %v2406, %v2406
    %v2551 = vmul.f32 %v2444, %v2444
    %v2552 = vmul.f32 %v2482, %v2482
    %v2553 = vmul.f32 %v2520, %v2520
    %v2554 = vadd.f32 %v2522, %v2523
    %v2555 = vadd.f32 %v2554, %v2524
    %v2556 = vadd.f32 %v2555, %v2525
    %v2557 = vadd.f32 %v2556, %v2526
    %v2558 = vadd.f32 %v2557, %v2527
    %v2559 = vadd.f32 %v2558, %v2528
    %v2560 = vadd.f32 %v2559, %v2529
    %2561 = vadd.xlane.f32.xlu0 %v2560
    %v2562 = vpop.xlane.xlu0 %2561
    %v2563 = vadd.f32 %v2530, %v2531
    %v2564 = vadd.f32 %v2563, %v2532
    %v2565 = vadd.f32 %v2564, %v2533
    %v2566 = vadd.f32 %v2565, %v2534
    %v2567 = vadd.f32 %v2566, %v2535
    %v2568 = vadd.f32 %v2567, %v2536
    %v2569 = vadd.f32 %v2568, %v2537
    %2570 = vadd.xlane.f32.xlu0 %v2569
    %v2571 = vpop.xlane.xlu0 %2570
    %v2572 = vadd.f32 %v2538, %v2539
    %v2573 = vadd.f32 %v2572, %v2540
    %v2574 = vadd.f32 %v2573, %v2541
    %v2575 = vadd.f32 %v2574, %v2542
    %v2576 = vadd.f32 %v2575, %v2543
    %v2577 = vadd.f32 %v2576, %v2544
    %v2578 = vadd.f32 %v2577, %v2545
    %2579 = vadd.xlane.f32.xlu0 %v2578
    %v2580 = vpop.xlane.xlu0 %2579
    %v2581 = vadd.f32 %v2546, %v2547
    %v2582 = vadd.f32 %v2581, %v2548
    %v2583 = vadd.f32 %v2582, %v2549
    %v2584 = vadd.f32 %v2583, %v2550
    %v2585 = vadd.f32 %v2584, %v2551
    %v2586 = vadd.f32 %v2585, %v2552
    %v2587 = vadd.f32 %v2586, %v2553
    %2588 = vadd.xlane.f32.xlu0 %v2587
    %v2589 = vpop.xlane.xlu0 %2588
    %v2590 = vmul.f32 %v2562, -0.0009765625
    %v2591 = vmul.f32 %v2571, -0.0009765625
    %v2592 = vmul.f32 %v2580, -0.0009765625
    %v2593 = vmul.f32 %v2589, -0.0009765625
    %vm2594 = vcmask 7168
    %2595 = vst.msk [vmem:[%s7] sm:$0xff] %vm2594, %v2590
    %2596 = vst.msk [vmem:[%s7 + $0x8] sm:$0xff] %vm2594, %v2591
    %2597 = vst.msk [vmem:[%s7 + $0x10] sm:$0xff] %vm2594, %v2592
    %2598 = vst.msk [vmem:[%s7 + $0x18] sm:$0xff] %vm2594, %v2593
    // Predicated region
    $region54: #{tpu_custom_call.1} parent=1 // pred_check
      _
    $region55: #{tpu_custom_call.1} parent=1 // pred_check_branch
      %2600 = sbr.rel (0) target = $region57
    $region56: #{tpu_custom_call.1} parent=1 // pred_region
      _
    $region57: #{tpu_custom_call.1} parent=1 // pred_fallthru
      _
    // Predicated region
    $region58: #{tpu_custom_call.1} parent=1 // pred_check
      _
    $region59: #{tpu_custom_call.1} parent=1 // pred_check_branch
      %2602 = sbr.rel (0) target = $region61
    $region60: #{tpu_custom_call.1} parent=1 // pred_region
      _
    $region61: #{tpu_custom_call.1} parent=1 // pred_fallthru
      _
    %2603 = vsyncpa [#allocation3], 1
    %2604 = vsyncpa [#allocation5], 1
    %2605 = vsyncpa [#allocation8], 1
    %2606 = vsyncpa [#allocation11], 1

</llo_original>
